<compile_context>
chip_gen: v5e
topology: v5e:2x2
jax: 0.10.0
libtpu: 0.0.40
codegen_flags: <defaults>
</compile_context>

<pallas_src>
import functools
import math

import jax
import jax.numpy as jnp
from jax.experimental import pallas as pl
from jax.experimental.pallas import tpu as pltpu


def _local_block_kernel(
    x_ref, cw_ref, cb_ref, pw1_w_ref, pw1_b_ref, pw2_w_ref, pw2_b_ref,
    se1_w_ref, se1_b_ref, se2_w_ref, se2_b_ref, pool_ref, expand_ref,
    o_ref, buf_ref, *, seq, width, nums, ksize, dilation, eps, pad):
    """Fused LocalBlock forward on a (C, B*T) lane-dense slab."""
    C, BT = x_ref.shape
    inv_bt = 1.0 / float(BT)

    def batch_norm(v):
        # Training-mode BatchNorm1d (gamma=1, beta=0): per-channel stats over (B, T).
        # Two-pass mean / centred variance (no E[x^2]-E[x]^2 cancellation).
        m = jnp.sum(v, axis=-1, keepdims=True) * inv_bt
        c = v - m
        var = jnp.sum(c * c, axis=-1, keepdims=True) * inv_bt
        return c * jax.lax.rsqrt(var + eps)

    x = x_ref[...]                                       # (C, B*T) original input slab
    xn = batch_norm(x)                                   # norm1

    # Position of each lane inside its length-T segment (for conv edge masking).
    tpos = jax.lax.broadcasted_iota(jnp.int32, (1, BT), 1) % seq

    # Per-tap shifts and validity masks (hoisted out of the group loop).
    shifts = [(j - ksize // 2) * dilation for j in range(ksize)]
    tap_valid = []
    for s in shifts:
        if s == 0:
            tap_valid.append(None)
        elif s > 0:
            tap_valid.append(tpos < (seq - s))
        else:
            tap_valid.append(tpos >= (-s))

    buf_ref[...] = jnp.zeros_like(buf_ref)               # halo scratch (masks cover edges)

    # ---- res2conv1d: sequential chain of (conv -> relu -> BN) over channel groups ----
    outs = []
    sp = None
    for i in range(nums):
        grp = xn[i * width:(i + 1) * width, :]           # aligned 8-row sublane slice
        sp = grp if i == 0 else sp + grp
        buf_ref[:, pl.ds(pad, BT)] = sp                  # 128-aligned store into halo buf
        taps = []
        for j, s in enumerate(shifts):
            tap = buf_ref[:, pl.ds(pad + s, BT)]         # temporally shifted view of sp
            if tap_valid[j] is not None:
                tap = jnp.where(tap_valid[j], tap, 0.0)  # zero outside each batch segment
            taps.append(tap)
        taps = jnp.concatenate(taps, axis=0)             # (ksize*width, B*T), aligned concat
        conv = jnp.dot(cw_ref[i], taps,
                       preferred_element_type=jnp.float32) + cb_ref[i]
        sp = batch_norm(jnp.maximum(conv, 0.0))          # relu -> BN
        outs.append(sp)
    outs.append(xn[nums * width:, :])                    # last group passes through
    r2 = jnp.concatenate(outs, axis=0)                   # (C, B*T)

    # ---- pointwise 1x1 convs: single full-slab MXU matmuls ---------------------------
    h = jnp.maximum(
        jnp.dot(pw1_w_ref[...], r2, preferred_element_type=jnp.float32)
        + pw1_b_ref[...], 0.0)
    p = (jnp.dot(pw2_w_ref[...], h, preferred_element_type=jnp.float32)
         + pw2_b_ref[...])                               # (C, B*T)

    # ---- SEModule, batched across B via pool / expand matmuls ------------------------
    pooled = jnp.dot(p, pool_ref[...],
                     preferred_element_type=jnp.float32)                 # (C, B)
    hid = jnp.maximum(
        jnp.dot(se1_w_ref[...], pooled, preferred_element_type=jnp.float32)
        + se1_b_ref[...], 0.0)                                           # (bneck, B)
    gate = jax.nn.sigmoid(
        jnp.dot(se2_w_ref[...], hid, preferred_element_type=jnp.float32)
        + se2_b_ref[...])                                                # (C, B)
    gate_full = jnp.dot(gate, expand_ref[...],
                        preferred_element_type=jnp.float32)              # (C, B*T)

    # ---- residual: skip is the ORIGINAL input; single unmasked lane-dense store ------
    o_ref[...] = x + p * gate_full


def local_block_forward(x, params, *, kernel_size=3, dilation=1, scale=4,
                        eps=1e-5):
    """Wrapper: layout plumbing + weight folding (glue), then one fused pallas_call."""
    B, C, T = x.shape
    width = C // scale
    nums = scale - 1
    assert C == width * scale, "dim must be divisible by scale"
    BT = B * T
    pad = 128
    assert (kernel_size // 2) * dilation <= pad

    # (B, C, T) -> lane-dense (C, B*T) slab; transpose back at the end (layout plumbing).
    xt = jnp.transpose(x.astype(jnp.float32), (1, 0, 2)).reshape(C, BT)

    # Fold the conv taps into one contraction: W_cat[i, o, j*width + c] = conv_w[i, o, c, j]
    cw = jnp.transpose(params["conv_w"].astype(jnp.float32),
                       (0, 1, 3, 2)).reshape(nums, width, kernel_size * width)
    cb = params["conv_b"].astype(jnp.float32).reshape(nums, width, 1)

    # SE pooling / gate broadcast as matmuls against per-batch segment indicators.
    seg = (jnp.arange(BT) // T)[None, :] == jnp.arange(B)[:, None]        # (B, B*T)
    expand_mat = seg.astype(jnp.float32)                                  # (B, B*T)
    pool_mat = expand_mat.T / float(T)                                    # (B*T, B)

    kernel = functools.partial(
        _local_block_kernel, seq=T, width=width, nums=nums,
        ksize=kernel_size, dilation=dilation, eps=eps, pad=pad)

    vmem = pl.BlockSpec(memory_space=pltpu.MemorySpace.VMEM)
    out = pl.pallas_call(
        kernel,
        out_shape=jax.ShapeDtypeStruct((C, BT), jnp.float32),
        in_specs=[vmem] * 13,
        out_specs=vmem,
        scratch_shapes=[pltpu.VMEM((width, 2 * pad + BT), jnp.float32)],
        compiler_params=pltpu.CompilerParams(
            vmem_limit_bytes=32 * 1024 * 1024),
    )(xt, cw, cb,
      params["pw1_w"].astype(jnp.float32),
      params["pw1_b"].astype(jnp.float32).reshape(C, 1),
      params["pw2_w"].astype(jnp.float32),
      params["pw2_b"].astype(jnp.float32).reshape(C, 1),
      params["se1_w"].astype(jnp.float32),
      params["se1_b"].astype(jnp.float32).reshape(-1, 1),
      params["se2_w"].astype(jnp.float32),
      params["se2_b"].astype(jnp.float32).reshape(C, 1),
      pool_mat, expand_mat)

    return out.reshape(C, B, T).transpose(1, 0, 2)


def _reference(x, params, *, dilation=1, scale=4, eps=1e-5):
    """Pure-JAX mirror of the PyTorch LocalBlock forward (training-mode BatchNorm1d)."""
    B, C, T = x.shape
    width = C // scale
    nums = scale - 1

    def bn(v):
        m = v.mean(axis=(0, 2), keepdims=True)
        var = v.var(axis=(0, 2), keepdims=True)
        return (v - m) / jnp.sqrt(var + eps)

    def conv1d_same(v, w, b, d):
        ks = w.shape[-1]
        padn = (ks // 2) * d
        vp = jnp.pad(v, ((0, 0), (0, 0), (padn, padn)))
        out = jnp.zeros((B, w.shape[0], T), jnp.float32)
        for j in range(ks):
            out = out + jnp.einsum("oc,bct->bot", w[:, :, j],
                                   vp[:, :, j * d:j * d + T])
        return out + b[None, :, None]

    xn = bn(x)
    spx = [xn[:, i * width:(i + 1) * width, :] for i in range(scale)]
    outs = []
    sp = None
    for i in range(nums):
        sp = spx[i] if i == 0 else sp + spx[i]
        sp = bn(jnp.maximum(
            conv1d_same(sp, params["conv_w"][i], params["conv_b"][i], dilation), 0.0))
        outs.append(sp)
    outs.append(spx[nums])
    r2 = jnp.concatenate(outs, axis=1)

    h = jnp.maximum(jnp.einsum("oc,bct->bot", params["pw1_w"], r2)
                    + params["pw1_b"][None, :, None], 0.0)
    p = (jnp.einsum("oc,bct->bot", params["pw2_w"], h)
         + params["pw2_b"][None, :, None])

    pooled = p.mean(axis=2)                                               # (B, C)
    hid = jnp.maximum(pooled @ params["se1_w"].T + params["se1_b"], 0.0)  # (B, bneck)
    gate = jax.nn.sigmoid(hid @ params["se2_w"].T + params["se2_b"])      # (B, C)
    return x + p * gate[:, :, None]


if __name__ == "__main__":
    # Small shapes consistent with the module: dim divisible by scale=4,
    # SE bottleneck = 128 (module default), lane-dense T.
    B, C, T = 2, 32, 128
    kernel_size, dilation, scale = 3, 1, 4
    bottleneck = 128
    width = C // scale
    nums = scale - 1

    key = jax.random.PRNGKey(0)
    ks = jax.random.split(key, 9)

    def winit(k, shape, fan_in):
        return jax.random.normal(k, shape, jnp.float32) * (1.0 / math.sqrt(fan_in))

    x = jax.random.normal(ks[0], (B, C, T), jnp.float32)
    params = dict(
        conv_w=winit(ks[1], (nums, width, width, kernel_size), width * kernel_size),
        conv_b=0.1 * jax.random.normal(ks[2], (nums, width), jnp.float32),
        pw1_w=winit(ks[3], (C, C), C),
        pw1_b=0.1 * jax.random.normal(ks[4], (C,), jnp.float32),
        pw2_w=winit(ks[5], (C, C), C),
        pw2_b=0.1 * jax.random.normal(ks[6], (C,), jnp.float32),
        se1_w=winit(ks[7], (bottleneck, C), C),
        se1_b=jnp.zeros((bottleneck,), jnp.float32),
        se2_w=winit(ks[8], (C, bottleneck), bottleneck),
        se2_b=jnp.zeros((C,), jnp.float32),
    )

    out = local_block_forward(x, params, kernel_size=kernel_size,
                              dilation=dilation, scale=scale)
    out = jax.block_until_ready(out)

    ref = _reference(x, params, dilation=dilation, scale=scale)
    assert out.shape == (B, C, T) and out.dtype == jnp.float32
    err = float(jnp.max(jnp.abs(out - ref)))
    assert jnp.allclose(out, ref, rtol=2e-3, atol=2e-3), f"max abs diff {err}"
    print("KERNEL_OK")
</pallas_src>

<mosaic_0001>
module attributes {stable_mosaic.version = 11 : i64} {
  func.func @_local_block_kernel(%arg0: memref<32x256xf32, #tpu.memory_space<vmem>>, %arg1: memref<3x8x24xf32, #tpu.memory_space<vmem>>, %arg2: memref<3x8x1xf32, #tpu.memory_space<vmem>>, %arg3: memref<32x32xf32, #tpu.memory_space<vmem>>, %arg4: memref<32x1xf32, #tpu.memory_space<vmem>>, %arg5: memref<32x32xf32, #tpu.memory_space<vmem>>, %arg6: memref<32x1xf32, #tpu.memory_space<vmem>>, %arg7: memref<128x32xf32, #tpu.memory_space<vmem>>, %arg8: memref<128x1xf32, #tpu.memory_space<vmem>>, %arg9: memref<32x128xf32, #tpu.memory_space<vmem>>, %arg10: memref<32x1xf32, #tpu.memory_space<vmem>>, %arg11: memref<256x2xf32, #tpu.memory_space<vmem>>, %arg12: memref<2x256xf32, #tpu.memory_space<vmem>>, %arg13: memref<32x256xf32, #tpu.memory_space<vmem>>, %arg14: memref<8x512xf32, #tpu.memory_space<vmem>>) attributes {dimension_semantics = [], scalar_prefetch = 0 : i64, scratch_operands = 1 : i64, tpu.core_type = #tpu.core_type<tc>} {
    %c0 = arith.constant 0 : index
    %c0_0 = arith.constant 0 : index
    %0 = vector.load %arg0[%c0, %c0_0] : memref<32x256xf32, #tpu.memory_space<vmem>>, vector<32x256xf32>
    %cst = arith.constant dense<0.000000e+00> : vector<32xf32>
    %1 = vector.multi_reduction <add>, %0, %cst [1] : vector<32x256xf32> to vector<32xf32>
    %2 = vector.shape_cast %1 : vector<32xf32> to vector<32x1xf32>
    %cst_1 = arith.constant 3.906250e-03 : f32
    %3 = vector.broadcast %cst_1 : f32 to vector<32x1xf32>
    %4 = arith.mulf %2, %3 : vector<32x1xf32>
    %5 = vector.broadcast %4 : vector<32x1xf32> to vector<32x256xf32>
    %6 = arith.subf %0, %5 : vector<32x256xf32>
    %7 = arith.mulf %6, %6 : vector<32x256xf32>
    %cst_2 = arith.constant dense<0.000000e+00> : vector<32xf32>
    %8 = vector.multi_reduction <add>, %7, %cst_2 [1] : vector<32x256xf32> to vector<32xf32>
    %9 = vector.shape_cast %8 : vector<32xf32> to vector<32x1xf32>
    %cst_3 = arith.constant 3.906250e-03 : f32
    %10 = vector.broadcast %cst_3 : f32 to vector<32x1xf32>
    %11 = arith.mulf %9, %10 : vector<32x1xf32>
    %cst_4 = arith.constant 9.99999974E-6 : f32
    %12 = vector.broadcast %cst_4 : f32 to vector<32x1xf32>
    %13 = arith.addf %11, %12 : vector<32x1xf32>
    %14 = math.rsqrt %13 : vector<32x1xf32>
    %15 = vector.broadcast %14 : vector<32x1xf32> to vector<32x256xf32>
    %16 = arith.mulf %6, %15 : vector<32x256xf32>
    %17 = tpu.iota {dimensions = array<i32: 1>} : vector<1x256xi32>
    %c128_i32 = arith.constant 128 : i32
    %c0_i32 = arith.constant 0 : i32
    %18 = arith.cmpi eq, %c128_i32, %c0_i32 : i32
    %c1_i32 = arith.constant 1 : i32
    %19 = arith.select %18, %c1_i32, %c128_i32 : i32
    %20 = vector.broadcast %19 : i32 to vector<1x256xi32>
    %21 = arith.remsi %17, %20 : vector<1x256xi32>
    %c0_i32_5 = arith.constant 0 : i32
    %22 = vector.broadcast %c0_i32_5 : i32 to vector<1x256xi32>
    %23 = arith.cmpi ne, %21, %22 : vector<1x256xi32>
    %c0_i32_6 = arith.constant 0 : i32
    %24 = vector.broadcast %c0_i32_6 : i32 to vector<1x256xi32>
    %25 = arith.cmpi slt, %21, %24 : vector<1x256xi32>
    %c0_i32_7 = arith.constant 0 : i32
    %26 = arith.cmpi slt, %19, %c0_i32_7 : i32
    %27 = vector.broadcast %26 : i1 to vector<1x256xi1>
    %28 = vector.broadcast %27 : vector<1x256xi1> to vector<1x256xi1>
    %29 = arith.xori %25, %28 : vector<1x256xi1>
    %30 = arith.andi %29, %23 : vector<1x256xi1>
    %31 = vector.broadcast %19 : i32 to vector<1x256xi32>
    %32 = arith.addi %21, %31 : vector<1x256xi32>
    %33 = arith.select %30, %32, %21 : vector<1x256xi1>, vector<1x256xi32>
    %c1_i32_8 = arith.constant 1 : i32
    %34 = vector.broadcast %c1_i32_8 : i32 to vector<1x256xi32>
    %35 = arith.cmpi sge, %33, %34 : vector<1x256xi32>
    %c127_i32 = arith.constant 127 : i32
    %36 = vector.broadcast %c127_i32 : i32 to vector<1x256xi32>
    %37 = arith.cmpi slt, %33, %36 : vector<1x256xi32>
    %cst_9 = arith.constant 0.000000e+00 : f32
    %38 = vector.broadcast %cst_9 : f32 to vector<8x512xf32>
    %c0_10 = arith.constant 0 : index
    %c0_11 = arith.constant 0 : index
    %39 = vector.load %arg14[%c0_10, %c0_11] : memref<8x512xf32, #tpu.memory_space<vmem>>, vector<8x512xf32>
    tpu.vector_store %arg14[%c0_10, %c0_11], %38 {strides = array<i32>} : memref<8x512xf32, #tpu.memory_space<vmem>>, vector<8x512xf32>,
    %40 = vector.extract_strided_slice %16 {offsets = [0, 0], sizes = [8, 256], strides = [1, 1]} : vector<32x256xf32> to vector<8x256xf32>
    %c0_12 = arith.constant 0 : index
    %c128 = arith.constant 128 : index
    %41 = vector.load %arg14[%c0_12, %c128] : memref<8x512xf32, #tpu.memory_space<vmem>>, vector<8x256xf32>
    tpu.vector_store %arg14[%c0_12, %c128], %40 {strides = array<i32>} : memref<8x512xf32, #tpu.memory_space<vmem>>, vector<8x256xf32>,
    %c0_13 = arith.constant 0 : index
    %c127 = arith.constant 127 : index
    %42 = vector.load %arg14[%c0_13, %c127] : memref<8x512xf32, #tpu.memory_space<vmem>>, vector<8x256xf32>
    %cst_14 = arith.constant 0.000000e+00 : f32
    %43 = vector.shape_cast %35 : vector<1x256xi1> to vector<1x256xi1>
    %44 = vector.broadcast %43 : vector<1x256xi1> to vector<8x256xi1>
    %45 = vector.broadcast %cst_14 : f32 to vector<8x256xf32>
    %46 = arith.select %44, %42, %45 : vector<8x256xi1>, vector<8x256xf32>
    %c0_15 = arith.constant 0 : index
    %c128_16 = arith.constant 128 : index
    %47 = vector.load %arg14[%c0_15, %c128_16] : memref<8x512xf32, #tpu.memory_space<vmem>>, vector<8x256xf32>
    %c0_17 = arith.constant 0 : index
    %c129 = arith.constant 129 : index
    %48 = vector.load %arg14[%c0_17, %c129] : memref<8x512xf32, #tpu.memory_space<vmem>>, vector<8x256xf32>
    %cst_18 = arith.constant 0.000000e+00 : f32
    %49 = vector.shape_cast %37 : vector<1x256xi1> to vector<1x256xi1>
    %50 = vector.broadcast %49 : vector<1x256xi1> to vector<8x256xi1>
    %51 = vector.broadcast %cst_18 : f32 to vector<8x256xf32>
    %52 = arith.select %50, %48, %51 : vector<8x256xi1>, vector<8x256xf32>
    %53 = tpu.concatenate %46, %47, %52 in 0 : vector<8x256xf32>, vector<8x256xf32>, vector<8x256xf32> -> vector<24x256xf32>
    %c0_19 = arith.constant 0 : index
    %c0_20 = arith.constant 0 : index
    %c0_21 = arith.constant 0 : index
    %54 = vector.load %arg1[%c0_19, %c0_20, %c0_21] : memref<3x8x24xf32, #tpu.memory_space<vmem>>, vector<1x8x24xf32>
    %55 = vector.shape_cast %54 : vector<1x8x24xf32> to vector<8x24xf32>
    %cst_22 = arith.constant dense<0.000000e+00> : vector<8x256xf32>
    %56 = tpu.matmul %55, %53, %cst_22 {dimension_numbers = #tpu.dot_dimension_numbers<[1], [0], [0], [1], [0, 0, 1, 1], [], []>} : vector<8x24xf32>, vector<24x256xf32>, vector<8x256xf32> -> vector<8x256xf32>
    %c0_23 = arith.constant 0 : index
    %c0_24 = arith.constant 0 : index
    %c0_25 = arith.constant 0 : index
    %57 = vector.load %arg2[%c0_23, %c0_24, %c0_25] : memref<3x8x1xf32, #tpu.memory_space<vmem>>, vector<1x8x1xf32>
    %58 = vector.shape_cast %57 : vector<1x8x1xf32> to vector<8x1xf32>
    %59 = vector.broadcast %58 : vector<8x1xf32> to vector<8x256xf32>
    %60 = arith.addf %56, %59 : vector<8x256xf32>
    %cst_26 = arith.constant 0.000000e+00 : f32
    %61 = vector.broadcast %cst_26 : f32 to vector<8x256xf32>
    %62 = arith.maximumf %60, %61 : vector<8x256xf32>
    %cst_27 = arith.constant dense<0.000000e+00> : vector<8xf32>
    %63 = vector.multi_reduction <add>, %62, %cst_27 [1] : vector<8x256xf32> to vector<8xf32>
    %64 = vector.shape_cast %63 : vector<8xf32> to vector<8x1xf32>
    %cst_28 = arith.constant 3.906250e-03 : f32
    %65 = vector.broadcast %cst_28 : f32 to vector<8x1xf32>
    %66 = arith.mulf %64, %65 : vector<8x1xf32>
    %67 = vector.broadcast %66 : vector<8x1xf32> to vector<8x256xf32>
    %68 = arith.subf %62, %67 : vector<8x256xf32>
    %69 = arith.mulf %68, %68 : vector<8x256xf32>
    %cst_29 = arith.constant dense<0.000000e+00> : vector<8xf32>
    %70 = vector.multi_reduction <add>, %69, %cst_29 [1] : vector<8x256xf32> to vector<8xf32>
    %71 = vector.shape_cast %70 : vector<8xf32> to vector<8x1xf32>
    %cst_30 = arith.constant 3.906250e-03 : f32
    %72 = vector.broadcast %cst_30 : f32 to vector<8x1xf32>
    %73 = arith.mulf %71, %72 : vector<8x1xf32>
    %cst_31 = arith.constant 9.99999974E-6 : f32
    %74 = vector.broadcast %cst_31 : f32 to vector<8x1xf32>
    %75 = arith.addf %73, %74 : vector<8x1xf32>
    %76 = math.rsqrt %75 : vector<8x1xf32>
    %77 = vector.broadcast %76 : vector<8x1xf32> to vector<8x256xf32>
    %78 = arith.mulf %68, %77 : vector<8x256xf32>
    %79 = vector.extract_strided_slice %16 {offsets = [8, 0], sizes = [8, 256], strides = [1, 1]} : vector<32x256xf32> to vector<8x256xf32>
    %80 = arith.addf %78, %79 : vector<8x256xf32>
    %c0_32 = arith.constant 0 : index
    %c128_33 = arith.constant 128 : index
    %81 = vector.load %arg14[%c0_32, %c128_33] : memref<8x512xf32, #tpu.memory_space<vmem>>, vector<8x256xf32>
    tpu.vector_store %arg14[%c0_32, %c128_33], %80 {strides = array<i32>} : memref<8x512xf32, #tpu.memory_space<vmem>>, vector<8x256xf32>,
    %c0_34 = arith.constant 0 : index
    %c127_35 = arith.constant 127 : index
    %82 = vector.load %arg14[%c0_34, %c127_35] : memref<8x512xf32, #tpu.memory_space<vmem>>, vector<8x256xf32>
    %cst_36 = arith.constant 0.000000e+00 : f32
    %83 = vector.shape_cast %35 : vector<1x256xi1> to vector<1x256xi1>
    %84 = vector.broadcast %83 : vector<1x256xi1> to vector<8x256xi1>
    %85 = vector.broadcast %cst_36 : f32 to vector<8x256xf32>
    %86 = arith.select %84, %82, %85 : vector<8x256xi1>, vector<8x256xf32>
    %c0_37 = arith.constant 0 : index
    %c128_38 = arith.constant 128 : index
    %87 = vector.load %arg14[%c0_37, %c128_38] : memref<8x512xf32, #tpu.memory_space<vmem>>, vector<8x256xf32>
    %c0_39 = arith.constant 0 : index
    %c129_40 = arith.constant 129 : index
    %88 = vector.load %arg14[%c0_39, %c129_40] : memref<8x512xf32, #tpu.memory_space<vmem>>, vector<8x256xf32>
    %cst_41 = arith.constant 0.000000e+00 : f32
    %89 = vector.shape_cast %37 : vector<1x256xi1> to vector<1x256xi1>
    %90 = vector.broadcast %89 : vector<1x256xi1> to vector<8x256xi1>
    %91 = vector.broadcast %cst_41 : f32 to vector<8x256xf32>
    %92 = arith.select %90, %88, %91 : vector<8x256xi1>, vector<8x256xf32>
    %93 = tpu.concatenate %86, %87, %92 in 0 : vector<8x256xf32>, vector<8x256xf32>, vector<8x256xf32> -> vector<24x256xf32>
    %c1 = arith.constant 1 : index
    %c0_42 = arith.constant 0 : index
    %c0_43 = arith.constant 0 : index
    %94 = vector.load %arg1[%c1, %c0_42, %c0_43] : memref<3x8x24xf32, #tpu.memory_space<vmem>>, vector<1x8x24xf32>
    %95 = vector.shape_cast %94 : vector<1x8x24xf32> to vector<8x24xf32>
    %cst_44 = arith.constant dense<0.000000e+00> : vector<8x256xf32>
    %96 = tpu.matmul %95, %93, %cst_44 {dimension_numbers = #tpu.dot_dimension_numbers<[1], [0], [0], [1], [0, 0, 1, 1], [], []>} : vector<8x24xf32>, vector<24x256xf32>, vector<8x256xf32> -> vector<8x256xf32>
    %c1_45 = arith.constant 1 : index
    %c0_46 = arith.constant 0 : index
    %c0_47 = arith.constant 0 : index
    %97 = vector.load %arg2[%c1_45, %c0_46, %c0_47] : memref<3x8x1xf32, #tpu.memory_space<vmem>>, vector<1x8x1xf32>
    %98 = vector.shape_cast %97 : vector<1x8x1xf32> to vector<8x1xf32>
    %99 = vector.broadcast %98 : vector<8x1xf32> to vector<8x256xf32>
    %100 = arith.addf %96, %99 : vector<8x256xf32>
    %cst_48 = arith.constant 0.000000e+00 : f32
    %101 = vector.broadcast %cst_48 : f32 to vector<8x256xf32>
    %102 = arith.maximumf %100, %101 : vector<8x256xf32>
    %cst_49 = arith.constant dense<0.000000e+00> : vector<8xf32>
    %103 = vector.multi_reduction <add>, %102, %cst_49 [1] : vector<8x256xf32> to vector<8xf32>
    %104 = vector.shape_cast %103 : vector<8xf32> to vector<8x1xf32>
    %cst_50 = arith.constant 3.906250e-03 : f32
    %105 = vector.broadcast %cst_50 : f32 to vector<8x1xf32>
    %106 = arith.mulf %104, %105 : vector<8x1xf32>
    %107 = vector.broadcast %106 : vector<8x1xf32> to vector<8x256xf32>
    %108 = arith.subf %102, %107 : vector<8x256xf32>
    %109 = arith.mulf %108, %108 : vector<8x256xf32>
    %cst_51 = arith.constant dense<0.000000e+00> : vector<8xf32>
    %110 = vector.multi_reduction <add>, %109, %cst_51 [1] : vector<8x256xf32> to vector<8xf32>
    %111 = vector.shape_cast %110 : vector<8xf32> to vector<8x1xf32>
    %cst_52 = arith.constant 3.906250e-03 : f32
    %112 = vector.broadcast %cst_52 : f32 to vector<8x1xf32>
    %113 = arith.mulf %111, %112 : vector<8x1xf32>
    %cst_53 = arith.constant 9.99999974E-6 : f32
    %114 = vector.broadcast %cst_53 : f32 to vector<8x1xf32>
    %115 = arith.addf %113, %114 : vector<8x1xf32>
    %116 = math.rsqrt %115 : vector<8x1xf32>
    %117 = vector.broadcast %116 : vector<8x1xf32> to vector<8x256xf32>
    %118 = arith.mulf %108, %117 : vector<8x256xf32>
    %119 = vector.extract_strided_slice %16 {offsets = [16, 0], sizes = [8, 256], strides = [1, 1]} : vector<32x256xf32> to vector<8x256xf32>
    %120 = arith.addf %118, %119 : vector<8x256xf32>
    %c0_54 = arith.constant 0 : index
    %c128_55 = arith.constant 128 : index
    %121 = vector.load %arg14[%c0_54, %c128_55] : memref<8x512xf32, #tpu.memory_space<vmem>>, vector<8x256xf32>
    tpu.vector_store %arg14[%c0_54, %c128_55], %120 {strides = array<i32>} : memref<8x512xf32, #tpu.memory_space<vmem>>, vector<8x256xf32>,
    %c0_56 = arith.constant 0 : index
    %c127_57 = arith.constant 127 : index
    %122 = vector.load %arg14[%c0_56, %c127_57] : memref<8x512xf32, #tpu.memory_space<vmem>>, vector<8x256xf32>
    %cst_58 = arith.constant 0.000000e+00 : f32
    %123 = vector.shape_cast %35 : vector<1x256xi1> to vector<1x256xi1>
    %124 = vector.broadcast %123 : vector<1x256xi1> to vector<8x256xi1>
    %125 = vector.broadcast %cst_58 : f32 to vector<8x256xf32>
    %126 = arith.select %124, %122, %125 : vector<8x256xi1>, vector<8x256xf32>
    %c0_59 = arith.constant 0 : index
    %c128_60 = arith.constant 128 : index
    %127 = vector.load %arg14[%c0_59, %c128_60] : memref<8x512xf32, #tpu.memory_space<vmem>>, vector<8x256xf32>
    %c0_61 = arith.constant 0 : index
    %c129_62 = arith.constant 129 : index
    %128 = vector.load %arg14[%c0_61, %c129_62] : memref<8x512xf32, #tpu.memory_space<vmem>>, vector<8x256xf32>
    %cst_63 = arith.constant 0.000000e+00 : f32
    %129 = vector.shape_cast %37 : vector<1x256xi1> to vector<1x256xi1>
    %130 = vector.broadcast %129 : vector<1x256xi1> to vector<8x256xi1>
    %131 = vector.broadcast %cst_63 : f32 to vector<8x256xf32>
    %132 = arith.select %130, %128, %131 : vector<8x256xi1>, vector<8x256xf32>
    %133 = tpu.concatenate %126, %127, %132 in 0 : vector<8x256xf32>, vector<8x256xf32>, vector<8x256xf32> -> vector<24x256xf32>
    %c2 = arith.constant 2 : index
    %c0_64 = arith.constant 0 : index
    %c0_65 = arith.constant 0 : index
    %134 = vector.load %arg1[%c2, %c0_64, %c0_65] : memref<3x8x24xf32, #tpu.memory_space<vmem>>, vector<1x8x24xf32>
    %135 = vector.shape_cast %134 : vector<1x8x24xf32> to vector<8x24xf32>
    %cst_66 = arith.constant dense<0.000000e+00> : vector<8x256xf32>
    %136 = tpu.matmul %135, %133, %cst_66 {dimension_numbers = #tpu.dot_dimension_numbers<[1], [0], [0], [1], [0, 0, 1, 1], [], []>} : vector<8x24xf32>, vector<24x256xf32>, vector<8x256xf32> -> vector<8x256xf32>
    %c2_67 = arith.constant 2 : index
    %c0_68 = arith.constant 0 : index
    %c0_69 = arith.constant 0 : index
    %137 = vector.load %arg2[%c2_67, %c0_68, %c0_69] : memref<3x8x1xf32, #tpu.memory_space<vmem>>, vector<1x8x1xf32>
    %138 = vector.shape_cast %137 : vector<1x8x1xf32> to vector<8x1xf32>
    %139 = vector.broadcast %138 : vector<8x1xf32> to vector<8x256xf32>
    %140 = arith.addf %136, %139 : vector<8x256xf32>
    %cst_70 = arith.constant 0.000000e+00 : f32
    %141 = vector.broadcast %cst_70 : f32 to vector<8x256xf32>
    %142 = arith.maximumf %140, %141 : vector<8x256xf32>
    %cst_71 = arith.constant dense<0.000000e+00> : vector<8xf32>
    %143 = vector.multi_reduction <add>, %142, %cst_71 [1] : vector<8x256xf32> to vector<8xf32>
    %144 = vector.shape_cast %143 : vector<8xf32> to vector<8x1xf32>
    %cst_72 = arith.constant 3.906250e-03 : f32
    %145 = vector.broadcast %cst_72 : f32 to vector<8x1xf32>
    %146 = arith.mulf %144, %145 : vector<8x1xf32>
    %147 = vector.broadcast %146 : vector<8x1xf32> to vector<8x256xf32>
    %148 = arith.subf %142, %147 : vector<8x256xf32>
    %149 = arith.mulf %148, %148 : vector<8x256xf32>
    %cst_73 = arith.constant dense<0.000000e+00> : vector<8xf32>
    %150 = vector.multi_reduction <add>, %149, %cst_73 [1] : vector<8x256xf32> to vector<8xf32>
    %151 = vector.shape_cast %150 : vector<8xf32> to vector<8x1xf32>
    %cst_74 = arith.constant 3.906250e-03 : f32
    %152 = vector.broadcast %cst_74 : f32 to vector<8x1xf32>
    %153 = arith.mulf %151, %152 : vector<8x1xf32>
    %cst_75 = arith.constant 9.99999974E-6 : f32
    %154 = vector.broadcast %cst_75 : f32 to vector<8x1xf32>
    %155 = arith.addf %153, %154 : vector<8x1xf32>
    %156 = math.rsqrt %155 : vector<8x1xf32>
    %157 = vector.broadcast %156 : vector<8x1xf32> to vector<8x256xf32>
    %158 = arith.mulf %148, %157 : vector<8x256xf32>
    %159 = vector.extract_strided_slice %16 {offsets = [24, 0], sizes = [8, 256], strides = [1, 1]} : vector<32x256xf32> to vector<8x256xf32>
    %160 = tpu.concatenate %78, %118, %158, %159 in 0 : vector<8x256xf32>, vector<8x256xf32>, vector<8x256xf32>, vector<8x256xf32> -> vector<32x256xf32>
    %c0_76 = arith.constant 0 : index
    %c0_77 = arith.constant 0 : index
    %161 = vector.load %arg3[%c0_76, %c0_77] : memref<32x32xf32, #tpu.memory_space<vmem>>, vector<32x32xf32>
    %cst_78 = arith.constant dense<0.000000e+00> : vector<32x256xf32>
    %162 = tpu.matmul %161, %160, %cst_78 {dimension_numbers = #tpu.dot_dimension_numbers<[1], [0], [0], [1], [0, 0, 1, 1], [], []>} : vector<32x32xf32>, vector<32x256xf32>, vector<32x256xf32> -> vector<32x256xf32>
    %c0_79 = arith.constant 0 : index
    %c0_80 = arith.constant 0 : index
    %163 = vector.load %arg4[%c0_79, %c0_80] : memref<32x1xf32, #tpu.memory_space<vmem>>, vector<32x1xf32>
    %164 = vector.broadcast %163 : vector<32x1xf32> to vector<32x256xf32>
    %165 = arith.addf %162, %164 : vector<32x256xf32>
    %cst_81 = arith.constant 0.000000e+00 : f32
    %166 = vector.broadcast %cst_81 : f32 to vector<32x256xf32>
    %167 = arith.maximumf %165, %166 : vector<32x256xf32>
    %c0_82 = arith.constant 0 : index
    %c0_83 = arith.constant 0 : index
    %168 = vector.load %arg5[%c0_82, %c0_83] : memref<32x32xf32, #tpu.memory_space<vmem>>, vector<32x32xf32>
    %cst_84 = arith.constant dense<0.000000e+00> : vector<32x256xf32>
    %169 = tpu.matmul %168, %167, %cst_84 {dimension_numbers = #tpu.dot_dimension_numbers<[1], [0], [0], [1], [0, 0, 1, 1], [], []>} : vector<32x32xf32>, vector<32x256xf32>, vector<32x256xf32> -> vector<32x256xf32>
    %c0_85 = arith.constant 0 : index
    %c0_86 = arith.constant 0 : index
    %170 = vector.load %arg6[%c0_85, %c0_86] : memref<32x1xf32, #tpu.memory_space<vmem>>, vector<32x1xf32>
    %171 = vector.broadcast %170 : vector<32x1xf32> to vector<32x256xf32>
    %172 = arith.addf %169, %171 : vector<32x256xf32>
    %c0_87 = arith.constant 0 : index
    %c0_88 = arith.constant 0 : index
    %173 = vector.load %arg11[%c0_87, %c0_88] : memref<256x2xf32, #tpu.memory_space<vmem>>, vector<256x2xf32>
    %cst_89 = arith.constant dense<0.000000e+00> : vector<32x2xf32>
    %174 = tpu.matmul %172, %173, %cst_89 {dimension_numbers = #tpu.dot_dimension_numbers<[1], [0], [0], [1], [0, 0, 1, 1], [], []>} : vector<32x256xf32>, vector<256x2xf32>, vector<32x2xf32> -> vector<32x2xf32>
    %c0_90 = arith.constant 0 : index
    %c0_91 = arith.constant 0 : index
    %175 = vector.load %arg7[%c0_90, %c0_91] : memref<128x32xf32, #tpu.memory_space<vmem>>, vector<128x32xf32>
    %cst_92 = arith.constant dense<0.000000e+00> : vector<128x2xf32>
    %176 = tpu.matmul %175, %174, %cst_92 {dimension_numbers = #tpu.dot_dimension_numbers<[1], [0], [0], [1], [0, 0, 1, 1], [], []>} : vector<128x32xf32>, vector<32x2xf32>, vector<128x2xf32> -> vector<128x2xf32>
    %c0_93 = arith.constant 0 : index
    %c0_94 = arith.constant 0 : index
    %177 = vector.load %arg8[%c0_93, %c0_94] : memref<128x1xf32, #tpu.memory_space<vmem>>, vector<128x1xf32>
    %178 = vector.broadcast %177 : vector<128x1xf32> to vector<128x2xf32>
    %179 = arith.addf %176, %178 : vector<128x2xf32>
    %cst_95 = arith.constant 0.000000e+00 : f32
    %180 = vector.broadcast %cst_95 : f32 to vector<128x2xf32>
    %181 = arith.maximumf %179, %180 : vector<128x2xf32>
    %c0_96 = arith.constant 0 : index
    %c0_97 = arith.constant 0 : index
    %182 = vector.load %arg9[%c0_96, %c0_97] : memref<32x128xf32, #tpu.memory_space<vmem>>, vector<32x128xf32>
    %cst_98 = arith.constant dense<0.000000e+00> : vector<32x2xf32>
    %183 = tpu.matmul %182, %181, %cst_98 {dimension_numbers = #tpu.dot_dimension_numbers<[1], [0], [0], [1], [0, 0, 1, 1], [], []>} : vector<32x128xf32>, vector<128x2xf32>, vector<32x2xf32> -> vector<32x2xf32>
    %c0_99 = arith.constant 0 : index
    %c0_100 = arith.constant 0 : index
    %184 = vector.load %arg10[%c0_99, %c0_100] : memref<32x1xf32, #tpu.memory_space<vmem>>, vector<32x1xf32>
    %185 = vector.broadcast %184 : vector<32x1xf32> to vector<32x2xf32>
    %186 = arith.addf %183, %185 : vector<32x2xf32>
    %187 = arith.negf %186 : vector<32x2xf32>
    %188 = math.exp %187 : vector<32x2xf32>
    %cst_101 = arith.constant 1.000000e+00 : f32
    %189 = vector.broadcast %cst_101 : f32 to vector<32x2xf32>
    %190 = arith.addf %189, %188 : vector<32x2xf32>
    %191 = arith.divf %189, %190 : vector<32x2xf32>
    %c0_102 = arith.constant 0 : index
    %c0_103 = arith.constant 0 : index
    %192 = vector.load %arg12[%c0_102, %c0_103] : memref<2x256xf32, #tpu.memory_space<vmem>>, vector<2x256xf32>
    %cst_104 = arith.constant dense<0.000000e+00> : vector<32x256xf32>
    %193 = tpu.matmul %191, %192, %cst_104 {dimension_numbers = #tpu.dot_dimension_numbers<[1], [0], [0], [1], [0, 0, 1, 1], [], []>} : vector<32x2xf32>, vector<2x256xf32>, vector<32x256xf32> -> vector<32x256xf32>
    %194 = arith.mulf %172, %193 : vector<32x256xf32>
    %195 = arith.addf %0, %194 : vector<32x256xf32>
    %c0_105 = arith.constant 0 : index
    %c0_106 = arith.constant 0 : index
    %196 = vector.load %arg13[%c0_105, %c0_106] : memref<32x256xf32, #tpu.memory_space<vmem>>, vector<32x256xf32>
    tpu.vector_store %arg13[%c0_105, %c0_106], %195 {strides = array<i32>} : memref<32x256xf32, #tpu.memory_space<vmem>>, vector<32x256xf32>,
    return
  }
}

</mosaic_0001>

<llo_original>
// kernel: tpu_custom_call.1
$region0: #{tpu_custom_call.1}
  #allocation0 [shape = 'u32[]', space=smem, size = 0x4, offset = 0x4, fixed_abs, tag = 'smem constant byte address 0x4 - core index']
  #allocation1 [shape = 'u32[72,128]{1,0:T(1,128)}', space=vmem, size = 0x9000, scoped, tag = 'internal scratch']
  #allocation2 [shape = 'f32[8,512]{1,0:T(8,128)}', space=vmem, size = 0x4000, scoped, tag = 'scratch operand']
  %s0 = inlined_call_operand.vmem [shape: f32[32,256], index: 0, kind: input, shape index: {}]
  %s1 = inlined_call_operand.vmem [shape: f32[3,8,24], index: 1, kind: input, shape index: {}]
  %s2 = inlined_call_operand.vmem [shape: f32[3,8,1], index: 2, kind: input, shape index: {}]
  %s3 = inlined_call_operand.vmem [shape: f32[32,32], index: 3, kind: input, shape index: {}]
  %s4 = inlined_call_operand.vmem [shape: f32[32,1], index: 4, kind: input, shape index: {}]
  %s5 = inlined_call_operand.vmem [shape: f32[32,32], index: 5, kind: input, shape index: {}]
  %s6 = inlined_call_operand.vmem [shape: f32[32,1], index: 6, kind: input, shape index: {}]
  %s7 = inlined_call_operand.vmem [shape: f32[128,32], index: 7, kind: input, shape index: {}]
  %s8 = inlined_call_operand.vmem [shape: f32[128,1], index: 8, kind: input, shape index: {}]
  %s9 = inlined_call_operand.vmem [shape: f32[32,128], index: 9, kind: input, shape index: {}]
  %s10 = inlined_call_operand.vmem [shape: f32[32,1], index: 10, kind: input, shape index: {}]
  %s11 = inlined_call_operand.vmem [shape: f32[256,2], index: 11, kind: input, shape index: {}]
  %s12 = inlined_call_operand.vmem [shape: f32[2,256], index: 12, kind: input, shape index: {}]
  %s13 = inlined_call_operand.hbm [shape: f32[32,256], index: 13, kind: output, shape index: {}]
  %s14 = sld [smem:[#allocation0]]
  $region62: #{tpu_custom_call.1} parent=0
    _
  %s16 = ssub.s32 1, %s14
  %s17 = scalar_select 0, %s16, %s14
  $region1: #{tpu_custom_call.1} parent=0
    #allocation3 [shape = 'u8[32768]{0}', space=vmem, size = 0x8000, scoped, tag = 'output window, operand 0, single buffered']
    #allocation4 [shape = 's32[1]{0}', space=sflag, size = 0x4, scoped, tag = 'scoped memory for tpu_custom_call.1']
    %18 = vsyncpa [#allocation4], 0
    // Predicated region
    $region2: #{tpu_custom_call.1} parent=1 // pred_check
      _
    $region3: #{tpu_custom_call.1} parent=1 // pred_check_branch
      %20 = sbr.rel (0) target = $region5
    $region4: #{tpu_custom_call.1} parent=1 // pred_region
      _
    $region5: #{tpu_custom_call.1} parent=1 // pred_fallthru
      _
    // Predicated region
    $region6: #{tpu_custom_call.1} parent=1 // pred_check
      _
    $region7: #{tpu_custom_call.1} parent=1 // pred_check_branch
      %22 = sbr.rel (0) target = $region9
    $region8: #{tpu_custom_call.1} parent=1 // pred_region
      _
    $region9: #{tpu_custom_call.1} parent=1 // pred_fallthru
      _
    // Predicated region
    $region10: #{tpu_custom_call.1} parent=1 // pred_check
      _
    $region11: #{tpu_custom_call.1} parent=1 // pred_check_branch
      %24 = sbr.rel (0) target = $region13
    $region12: #{tpu_custom_call.1} parent=1 // pred_region
      _
    $region13: #{tpu_custom_call.1} parent=1 // pred_fallthru
      _
    // Predicated region
    $region14: #{tpu_custom_call.1} parent=1 // pred_check
      _
    $region15: #{tpu_custom_call.1} parent=1 // pred_check_branch
      %26 = sbr.rel (0) target = $region17
    $region16: #{tpu_custom_call.1} parent=1 // pred_region
      _
    $region17: #{tpu_custom_call.1} parent=1 // pred_fallthru
      _
    // Predicated region
    $region18: #{tpu_custom_call.1} parent=1 // pred_check
      _
    $region19: #{tpu_custom_call.1} parent=1 // pred_check_branch
      %28 = sbr.rel (0) target = $region21
    $region20: #{tpu_custom_call.1} parent=1 // pred_region
      _
    $region21: #{tpu_custom_call.1} parent=1 // pred_fallthru
      _
    // Predicated region
    $region22: #{tpu_custom_call.1} parent=1 // pred_check
      _
    $region23: #{tpu_custom_call.1} parent=1 // pred_check_branch
      %30 = sbr.rel (0) target = $region25
    $region24: #{tpu_custom_call.1} parent=1 // pred_region
      _
    $region25: #{tpu_custom_call.1} parent=1 // pred_fallthru
      _
    // Predicated region
    $region26: #{tpu_custom_call.1} parent=1 // pred_check
      _
    $region27: #{tpu_custom_call.1} parent=1 // pred_check_branch
      %32 = sbr.rel (0) target = $region29
    $region28: #{tpu_custom_call.1} parent=1 // pred_region
      _
    $region29: #{tpu_custom_call.1} parent=1 // pred_fallthru
      _
    // Predicated region
    $region30: #{tpu_custom_call.1} parent=1 // pred_check
      _
    $region31: #{tpu_custom_call.1} parent=1 // pred_check_branch
      %34 = sbr.rel (0) target = $region33
    $region32: #{tpu_custom_call.1} parent=1 // pred_region
      _
    $region33: #{tpu_custom_call.1} parent=1 // pred_fallthru
      _
    // Predicated region
    $region34: #{tpu_custom_call.1} parent=1 // pred_check
      _
    $region35: #{tpu_custom_call.1} parent=1 // pred_check_branch
      %36 = sbr.rel (0) target = $region37
    $region36: #{tpu_custom_call.1} parent=1 // pred_region
      _
    $region37: #{tpu_custom_call.1} parent=1 // pred_fallthru
      _
    // Predicated region
    $region38: #{tpu_custom_call.1} parent=1 // pred_check
      _
    $region39: #{tpu_custom_call.1} parent=1 // pred_check_branch
      %38 = sbr.rel (0) target = $region41
    $region40: #{tpu_custom_call.1} parent=1 // pred_region
      _
    $region41: #{tpu_custom_call.1} parent=1 // pred_fallthru
      _
    // Predicated region
    $region42: #{tpu_custom_call.1} parent=1 // pred_check
      _
    $region43: #{tpu_custom_call.1} parent=1 // pred_check_branch
      %40 = sbr.rel (0) target = $region45
    $region44: #{tpu_custom_call.1} parent=1 // pred_region
      _
    $region45: #{tpu_custom_call.1} parent=1 // pred_fallthru
      _
    // Predicated region
    $region46: #{tpu_custom_call.1} parent=1 // pred_check
      _
    $region47: #{tpu_custom_call.1} parent=1 // pred_check_branch
      %42 = sbr.rel (0) target = $region49
    $region48: #{tpu_custom_call.1} parent=1 // pred_region
      _
    $region49: #{tpu_custom_call.1} parent=1 // pred_fallthru
      _
    // Predicated region
    $region50: #{tpu_custom_call.1} parent=1 // pred_check
      _
    $region51: #{tpu_custom_call.1} parent=1 // pred_check_branch
      %44 = sbr.rel (0) target = $region53
    $region52: #{tpu_custom_call.1} parent=1 // pred_region
      _
    $region53: #{tpu_custom_call.1} parent=1 // pred_fallthru
      _
    %v45 = vld [vmem:[%s0] sm:$0xff]
    %v46 = vld [vmem:[%s0 + $0x8] sm:$0xff]
    %v47 = vld [vmem:[%s0 + $0x10] sm:$0xff]
    %v48 = vld [vmem:[%s0 + $0x18] sm:$0xff]
    %v49 = vld [vmem:[%s0 + $0x20] sm:$0xff]
    %v50 = vld [vmem:[%s0 + $0x28] sm:$0xff]
    %v51 = vld [vmem:[%s0 + $0x30] sm:$0xff]
    %v52 = vld [vmem:[%s0 + $0x38] sm:$0xff]
    %v53 = vadd.f32 %v45, %v46
    %54 = vadd.xlane.f32.xlu0 %v53
    %v55 = vpop.xlane.xlu0 %54
    %v56 = vadd.f32 %v47, %v48
    %57 = vadd.xlane.f32.xlu0 %v56
    %v58 = vpop.xlane.xlu0 %57
    %v59 = vadd.f32 %v49, %v50
    %60 = vadd.xlane.f32.xlu0 %v59
    %v61 = vpop.xlane.xlu0 %60
    %v62 = vadd.f32 %v51, %v52
    %63 = vadd.xlane.f32.xlu0 %v62
    %v64 = vpop.xlane.xlu0 %63
    %v65 = vmul.f32 %v55, 0.00390625
    %v66 = vmul.f32 %v58, 0.00390625
    %v67 = vmul.f32 %v61, 0.00390625
    %v68 = vmul.f32 %v64, 0.00390625
    %v69 = vsub.f32 %v45, %v65
    %v70 = vsub.f32 %v46, %v65
    %v71 = vsub.f32 %v47, %v66
    %v72 = vsub.f32 %v48, %v66
    %v73 = vsub.f32 %v49, %v67
    %v74 = vsub.f32 %v50, %v67
    %v75 = vsub.f32 %v51, %v68
    %v76 = vsub.f32 %v52, %v68
    %v77 = vmul.f32 %v69, %v69
    %v78 = vmul.f32 %v70, %v70
    %v79 = vmul.f32 %v71, %v71
    %v80 = vmul.f32 %v72, %v72
    %v81 = vmul.f32 %v73, %v73
    %v82 = vmul.f32 %v74, %v74
    %v83 = vmul.f32 %v75, %v75
    %v84 = vmul.f32 %v76, %v76
    %v85 = vadd.f32 %v77, %v78
    %86 = vadd.xlane.f32.xlu0 %v85
    %v87 = vpop.xlane.xlu0 %86
    %v88 = vadd.f32 %v79, %v80
    %89 = vadd.xlane.f32.xlu0 %v88
    %v90 = vpop.xlane.xlu0 %89
    %v91 = vadd.f32 %v81, %v82
    %92 = vadd.xlane.f32.xlu0 %v91
    %v93 = vpop.xlane.xlu0 %92
    %v94 = vadd.f32 %v83, %v84
    %95 = vadd.xlane.f32.xlu0 %v94
    %v96 = vpop.xlane.xlu0 %95
    %v97 = vmul.f32 %v87, 0.00390625
    %v98 = vmul.f32 %v90, 0.00390625
    %v99 = vmul.f32 %v93, 0.00390625
    %v100 = vmul.f32 %v96, 0.00390625
    %v101 = vadd.f32 %v97, 1e-05
    %v102 = vadd.f32 %v98, 1e-05
    %v103 = vadd.f32 %v99, 1e-05
    %v104 = vadd.f32 %v100, 1e-05
    %v105 = vrsqrt.pop %v101
    %v106 = vmul.f32 %v105, %v101
    %v107 = vmul.f32 %v106, %v105
    %v108 = vmul.f32 0.5, %v107
    %v109 = vsub.f32 1.5, %v108
    %v110 = vmul.f32 %v105, %v109
    %vm111 = vweird.f32 %v101
    %vm112 = vweird.f32 %v105
    %vm113 = vmor %vm111, %vm112
    %v114 = vsel %vm113, %v105, %v110
    %v115 = vrsqrt.pop %v102
    %v116 = vmul.f32 %v115, %v102
    %v117 = vmul.f32 %v116, %v115
    %v118 = vmul.f32 0.5, %v117
    %v119 = vsub.f32 1.5, %v118
    %v120 = vmul.f32 %v115, %v119
    %vm121 = vweird.f32 %v102
    %vm122 = vweird.f32 %v115
    %vm123 = vmor %vm121, %vm122
    %v124 = vsel %vm123, %v115, %v120
    %v125 = vrsqrt.pop %v103
    %v126 = vmul.f32 %v125, %v103
    %v127 = vmul.f32 %v126, %v125
    %v128 = vmul.f32 0.5, %v127
    %v129 = vsub.f32 1.5, %v128
    %v130 = vmul.f32 %v125, %v129
    %vm131 = vweird.f32 %v103
    %vm132 = vweird.f32 %v125
    %vm133 = vmor %vm131, %vm132
    %v134 = vsel %vm133, %v125, %v130
    %v135 = vrsqrt.pop %v104
    %v136 = vmul.f32 %v135, %v104
    %v137 = vmul.f32 %v136, %v135
    %v138 = vmul.f32 0.5, %v137
    %v139 = vsub.f32 1.5, %v138
    %v140 = vmul.f32 %v135, %v139
    %vm141 = vweird.f32 %v104
    %vm142 = vweird.f32 %v135
    %vm143 = vmor %vm141, %vm142
    %v144 = vsel %vm143, %v135, %v140
    %v145 = vmul.f32 %v69, %v114
    %v146 = vmul.f32 %v70, %v114
    %v147 = vmul.f32 %v71, %v124
    %v148 = vmul.f32 %v72, %v124
    %v149 = vmul.f32 %v73, %v134
    %v150 = vmul.f32 %v74, %v134
    %v151 = vmul.f32 %v75, %v144
    %v152 = vmul.f32 %v76, %v144
    %v153 = vlaneseq
    %v154 = vand.u32 %v153, 127
    %v155 = vadd.s32 %v154, 128
    %vm156 = vcmp.lt.s32.totalorder %v154, 0
    %v157 = vsub.s32 0, %v154
    %v158 = vsel %vm156, %v157, %v154
    %v159 = vshrl.u32 %v158, 7
    %v160 = vand.u32 %v158, 127
    %v161 = vsub.s32 0, %v160
    %v162 = vsel %vm156, %v161, %v160
    %vm163 = vcmp.lt.s32.totalorder %v155, 0
    %v164 = vsub.s32 0, %v155
    %v165 = vsel %vm163, %v164, %v155
    %v166 = vshrl.u32 %v165, 7
    %v167 = vand.u32 %v165, 127
    %v168 = vsub.s32 0, %v167
    %v169 = vsel %vm163, %v168, %v167
    %vm170 = vcmp.ne.s32.totalorder %v162, 0
    %vm171 = vcmp.ne.s32.totalorder %v169, 0
    %vm172 = vcmp.lt.s32.totalorder %v162, 0
    %vm173 = vcmp.lt.s32.totalorder %v169, 0
    %vm174 = vmand %vm172, %vm170
    %vm175 = vmand %vm173, %vm171
    %v176 = vadd.s32 %v162, 128
    %v177 = vadd.s32 %v169, 128
    %v178 = vsel %vm174, %v176, %v162
    %v179 = vsel %vm175, %v177, %v169
    %vm180 = vcmp.ge.s32.totalorder %v178, 1
    %vm181 = vcmp.ge.s32.totalorder %v179, 1
    %vm182 = vcmp.lt.s32.totalorder %v178, 127
    %vm183 = vcmp.lt.s32.totalorder %v179, 127
    %184 = vst [vmem:[#allocation2] sm:$0xff] 0.0
    %185 = vst [vmem:[#allocation2 + $0x8] sm:$0xff] 0.0
    %186 = vst [vmem:[#allocation2 + $0x10] sm:$0xff] 0.0
    %187 = vst [vmem:[#allocation2 + $0x18] sm:$0xff] 0.0
    %188 = vst [vmem:[#allocation2 + $0x8] sm:$0xff] %v145
    %189 = vst [vmem:[#allocation2 + $0x10] sm:$0xff] %v146
    %v190 = vld [vmem:[#allocation2] sm:$0xff]
    %v191 = vld [vmem:[#allocation2 + $0x8] sm:$0xff]
    %v192 = vld [vmem:[#allocation2 + $0x10] sm:$0xff]
    %v193 = vsel %vm180, 1, 0
    %v194 = vsel %vm181, 1, 0
    %vm195 = vcmp.eq.s32.totalorder %v193, 1
    %vm196 = vcmp.eq.s32.totalorder %v194, 1
    %200 = vrot.lane.b32.xlu0 %v190, 1
    %v201 = vpop.permute.xlu0 %200
    %202 = vrot.lane.b32.xlu0 %v191, 1
    %v203 = vpop.permute.xlu0 %202
    %204 = vrot.lane.b32.xlu0 %v192, 1
    %v205 = vpop.permute.xlu0 %204
    %vm206 = vcmask 7168
    %v207 = vsel %vm206, %v201, %v203
    %v208 = vsel %vm206, %v203, %v205
    %v211 = vsel %vm195, %v207, 0.0
    %v212 = vsel %vm196, %v208, 0.0
    %v213 = vld [vmem:[#allocation2 + $0x8] sm:$0xff]
    %v214 = vld [vmem:[#allocation2 + $0x10] sm:$0xff]
    %v215 = vld [vmem:[#allocation2 + $0x18] sm:$0xff]
    %v216 = vsel %vm182, 1, 0
    %v217 = vsel %vm183, 1, 0
    %vm218 = vcmp.eq.s32.totalorder %v216, 1
    %vm219 = vcmp.eq.s32.totalorder %v217, 1
    %223 = vrot.lane.b32.xlu0 %v213, 127
    %v224 = vpop.permute.xlu0 %223
    %225 = vrot.lane.b32.xlu0 %v214, 127
    %v226 = vpop.permute.xlu0 %225
    %227 = vrot.lane.b32.xlu0 %v215, 127
    %v228 = vpop.permute.xlu0 %227
    %vm229 = vcmask 1039360
    %v230 = vsel %vm229, %v224, %v226
    %v231 = vsel %vm229, %v226, %v228
    %v234 = vsel %vm218, %v230, 0.0
    %v235 = vsel %vm219, %v231, 0.0
    %v236 = vld [vmem:[%s1] sm:$0xff]
    %v237 = vld [vmem:[%s2] sm:$0xff]
    %239 = vset.pattern.permute.xlu0 0
    %240 = vperm.xlu0 %239, %v237
    %v241 = vpop.permute.xlu0 %240
    %vm243 = vcmask 195584
    %v245 = vsel %vm243, %v236, 0
    %247 = vmatpush.msra.mxu0 0.0
    %248 = vmatpush.msra.mxu0 0.0
    %249 = vmatpush.msra.mxu0 0.0
    %250 = vmatpush.msra.mxu0 0.0
    %251 = vmatpush.msra.mxu0 0.0
    %252 = vmatpush.msra.mxu0 0.0
    %253 = vmatpush.msra.mxu0 0.0
    %254 = vmatpush.msra.mxu0 0.0
    %255 = vmatpush.msra.mxu0 0.0
    %256 = vmatpush.msra.mxu0 0.0
    %257 = vmatpush.msra.mxu0 0.0
    %258 = vmatpush.msra.mxu0 0.0
    %259 = vmatpush.msra.mxu0 0.0
    %260 = vmatpush.msra.mxu0 %v234
    %261 = vmatpush.msra.mxu0 %v191
    %262 = vmatpush.msra.mxu0 %v211
    %263 = vmatmul.f32.gmra.mxu0 %v245
    %v264 = vpop.f32.mrf.mxu0
    %v265 = vadd.f32 %v241, %v264
    %266 = vdwg.mxu0
    %267 = vmatpush.msra.mxu0 0.0
    %268 = vmatpush.msra.mxu0 0.0
    %269 = vmatpush.msra.mxu0 0.0
    %270 = vmatpush.msra.mxu0 0.0
    %271 = vmatpush.msra.mxu0 0.0
    %272 = vmatpush.msra.mxu0 0.0
    %273 = vmatpush.msra.mxu0 0.0
    %274 = vmatpush.msra.mxu0 0.0
    %275 = vmatpush.msra.mxu0 0.0
    %276 = vmatpush.msra.mxu0 0.0
    %277 = vmatpush.msra.mxu0 0.0
    %278 = vmatpush.msra.mxu0 0.0
    %279 = vmatpush.msra.mxu0 0.0
    %280 = vmatpush.msra.mxu0 %v235
    %281 = vmatpush.msra.mxu0 %v192
    %282 = vmatpush.msra.mxu0 %v212
    %283 = vmatmul.f32.gmra.mxu0 %v245
    %v284 = vpop.f32.mrf.mxu0
    %v285 = vadd.f32 %v241, %v284
    %286 = vdwg.mxu0
    %v287 = vmax.f32 %v265, 0.0
    %v288 = vmax.f32 %v285, 0.0
    %v289 = vadd.f32 %v287, %v288
    %290 = vadd.xlane.f32.xlu0 %v289
    %v291 = vpop.xlane.xlu0 %290
    %v292 = vmul.f32 %v291, 0.00390625
    %v293 = vsub.f32 %v287, %v292
    %v294 = vsub.f32 %v288, %v292
    %v295 = vmul.f32 %v293, %v293
    %v296 = vmul.f32 %v294, %v294
    %v297 = vadd.f32 %v295, %v296
    %298 = vadd.xlane.f32.xlu0 %v297
    %v299 = vpop.xlane.xlu0 %298
    %v300 = vmul.f32 %v299, 0.00390625
    %v301 = vadd.f32 %v300, 1e-05
    %v302 = vrsqrt.pop %v301
    %v303 = vmul.f32 %v302, %v301
    %v304 = vmul.f32 %v303, %v302
    %v305 = vmul.f32 0.5, %v304
    %v306 = vsub.f32 1.5, %v305
    %v307 = vmul.f32 %v302, %v306
    %vm308 = vweird.f32 %v301
    %vm309 = vweird.f32 %v302
    %vm310 = vmor %vm308, %vm309
    %v311 = vsel %vm310, %v302, %v307
    %v312 = vmul.f32 %v293, %v311
    %v313 = vmul.f32 %v294, %v311
    %v314 = vadd.f32 %v312, %v147
    %v315 = vadd.f32 %v313, %v148
    %316 = vst [vmem:[#allocation2 + $0x8] sm:$0xff] %v314
    %317 = vst [vmem:[#allocation2 + $0x10] sm:$0xff] %v315
    %v318 = vld [vmem:[#allocation2] sm:$0xff]
    %v319 = vld [vmem:[#allocation2 + $0x8] sm:$0xff]
    %v320 = vld [vmem:[#allocation2 + $0x10] sm:$0xff]
    %324 = vrot.lane.b32.xlu0 %v318, 1
    %v325 = vpop.permute.xlu0 %324
    %326 = vrot.lane.b32.xlu0 %v319, 1
    %v327 = vpop.permute.xlu0 %326
    %328 = vrot.lane.b32.xlu0 %v320, 1
    %v329 = vpop.permute.xlu0 %328
    %v330 = vsel %vm206, %v325, %v327
    %v331 = vsel %vm206, %v327, %v329
    %v334 = vsel %vm195, %v330, 0.0
    %v335 = vsel %vm196, %v331, 0.0
    %v336 = vld [vmem:[#allocation2 + $0x8] sm:$0xff]
    %v337 = vld [vmem:[#allocation2 + $0x10] sm:$0xff]
    %v338 = vld [vmem:[#allocation2 + $0x18] sm:$0xff]
    %342 = vrot.lane.b32.xlu0 %v336, 127
    %v343 = vpop.permute.xlu0 %342
    %344 = vrot.lane.b32.xlu0 %v337, 127
    %v345 = vpop.permute.xlu0 %344
    %346 = vrot.lane.b32.xlu0 %v338, 127
    %v347 = vpop.permute.xlu0 %346
    %v348 = vsel %vm229, %v343, %v345
    %v349 = vsel %vm229, %v345, %v347
    %v352 = vsel %vm218, %v348, 0.0
    %v353 = vsel %vm219, %v349, 0.0
    %s354 = scalar_lea.vmem %s1, 8
    %v355 = vld [vmem:[%s354] sm:$0xff]
    %s356 = scalar_lea.vmem %s2, 8
    %v357 = vld [vmem:[%s356] sm:$0xff]
    %359 = vset.pattern.permute.xlu0 0
    %360 = vperm.xlu0 %359, %v357
    %v361 = vpop.permute.xlu0 %360
    %v364 = vsel %vm243, %v355, 0
    %366 = vmatpush.msra.mxu0 0.0
    %367 = vmatpush.msra.mxu0 0.0
    %368 = vmatpush.msra.mxu0 0.0
    %369 = vmatpush.msra.mxu0 0.0
    %370 = vmatpush.msra.mxu0 0.0
    %371 = vmatpush.msra.mxu0 0.0
    %372 = vmatpush.msra.mxu0 0.0
    %373 = vmatpush.msra.mxu0 0.0
    %374 = vmatpush.msra.mxu0 0.0
    %375 = vmatpush.msra.mxu0 0.0
    %376 = vmatpush.msra.mxu0 0.0
    %377 = vmatpush.msra.mxu0 0.0
    %378 = vmatpush.msra.mxu0 0.0
    %379 = vmatpush.msra.mxu0 %v352
    %380 = vmatpush.msra.mxu0 %v319
    %381 = vmatpush.msra.mxu0 %v334
    %382 = vmatmul.f32.gmra.mxu0 %v364
    %v383 = vpop.f32.mrf.mxu0
    %v384 = vadd.f32 %v361, %v383
    %385 = vdwg.mxu0
    %386 = vmatpush.msra.mxu0 0.0
    %387 = vmatpush.msra.mxu0 0.0
    %388 = vmatpush.msra.mxu0 0.0
    %389 = vmatpush.msra.mxu0 0.0
    %390 = vmatpush.msra.mxu0 0.0
    %391 = vmatpush.msra.mxu0 0.0
    %392 = vmatpush.msra.mxu0 0.0
    %393 = vmatpush.msra.mxu0 0.0
    %394 = vmatpush.msra.mxu0 0.0
    %395 = vmatpush.msra.mxu0 0.0
    %396 = vmatpush.msra.mxu0 0.0
    %397 = vmatpush.msra.mxu0 0.0
    %398 = vmatpush.msra.mxu0 0.0
    %399 = vmatpush.msra.mxu0 %v353
    %400 = vmatpush.msra.mxu0 %v320
    %401 = vmatpush.msra.mxu0 %v335
    %402 = vmatmul.f32.gmra.mxu0 %v364
    %v403 = vpop.f32.mrf.mxu0
    %v404 = vadd.f32 %v361, %v403
    %405 = vdwg.mxu0
    %v406 = vmax.f32 %v384, 0.0
    %v407 = vmax.f32 %v404, 0.0
    %v408 = vadd.f32 %v406, %v407
    %409 = vadd.xlane.f32.xlu0 %v408
    %v410 = vpop.xlane.xlu0 %409
    %v411 = vmul.f32 %v410, 0.00390625
    %v412 = vsub.f32 %v406, %v411
    %v413 = vsub.f32 %v407, %v411
    %v414 = vmul.f32 %v412, %v412
    %v415 = vmul.f32 %v413, %v413
    %v416 = vadd.f32 %v414, %v415
    %417 = vadd.xlane.f32.xlu0 %v416
    %v418 = vpop.xlane.xlu0 %417
    %v419 = vmul.f32 %v418, 0.00390625
    %v420 = vadd.f32 %v419, 1e-05
    %v421 = vrsqrt.pop %v420
    %v422 = vmul.f32 %v421, %v420
    %v423 = vmul.f32 %v422, %v421
    %v424 = vmul.f32 0.5, %v423
    %v425 = vsub.f32 1.5, %v424
    %v426 = vmul.f32 %v421, %v425
    %vm427 = vweird.f32 %v420
    %vm428 = vweird.f32 %v421
    %vm429 = vmor %vm427, %vm428
    %v430 = vsel %vm429, %v421, %v426
    %v431 = vmul.f32 %v412, %v430
    %v432 = vmul.f32 %v413, %v430
    %v433 = vadd.f32 %v431, %v149
    %v434 = vadd.f32 %v432, %v150
    %435 = vst [vmem:[#allocation2 + $0x8] sm:$0xff] %v433
    %436 = vst [vmem:[#allocation2 + $0x10] sm:$0xff] %v434
    %v437 = vld [vmem:[#allocation2] sm:$0xff]
    %v438 = vld [vmem:[#allocation2 + $0x8] sm:$0xff]
    %v439 = vld [vmem:[#allocation2 + $0x10] sm:$0xff]
    %443 = vrot.lane.b32.xlu0 %v437, 1
    %v444 = vpop.permute.xlu0 %443
    %445 = vrot.lane.b32.xlu0 %v438, 1
    %v446 = vpop.permute.xlu0 %445
    %447 = vrot.lane.b32.xlu0 %v439, 1
    %v448 = vpop.permute.xlu0 %447
    %v449 = vsel %vm206, %v444, %v446
    %v450 = vsel %vm206, %v446, %v448
    %v453 = vsel %vm195, %v449, 0.0
    %v454 = vsel %vm196, %v450, 0.0
    %v455 = vld [vmem:[#allocation2 + $0x8] sm:$0xff]
    %v456 = vld [vmem:[#allocation2 + $0x10] sm:$0xff]
    %v457 = vld [vmem:[#allocation2 + $0x18] sm:$0xff]
    %461 = vrot.lane.b32.xlu0 %v455, 127
    %v462 = vpop.permute.xlu0 %461
    %463 = vrot.lane.b32.xlu0 %v456, 127
    %v464 = vpop.permute.xlu0 %463
    %465 = vrot.lane.b32.xlu0 %v457, 127
    %v466 = vpop.permute.xlu0 %465
    %v467 = vsel %vm229, %v462, %v464
    %v468 = vsel %vm229, %v464, %v466
    %v471 = vsel %vm218, %v467, 0.0
    %v472 = vsel %vm219, %v468, 0.0
    %s473 = scalar_lea.vmem %s1, 16
    %v474 = vld [vmem:[%s473] sm:$0xff]
    %s475 = scalar_lea.vmem %s2, 16
    %v476 = vld [vmem:[%s475] sm:$0xff]
    %478 = vset.pattern.permute.xlu0 0
    %479 = vperm.xlu0 %478, %v476
    %v480 = vpop.permute.xlu0 %479
    %v483 = vsel %vm243, %v474, 0
    %485 = vmatpush.msra.mxu0 0.0
    %486 = vmatpush.msra.mxu0 0.0
    %487 = vmatpush.msra.mxu0 0.0
    %488 = vmatpush.msra.mxu0 0.0
    %489 = vmatpush.msra.mxu0 0.0
    %490 = vmatpush.msra.mxu0 0.0
    %491 = vmatpush.msra.mxu0 0.0
    %492 = vmatpush.msra.mxu0 0.0
    %493 = vmatpush.msra.mxu0 0.0
    %494 = vmatpush.msra.mxu0 0.0
    %495 = vmatpush.msra.mxu0 0.0
    %496 = vmatpush.msra.mxu0 0.0
    %497 = vmatpush.msra.mxu0 0.0
    %498 = vmatpush.msra.mxu0 %v471
    %499 = vmatpush.msra.mxu0 %v438
    %500 = vmatpush.msra.mxu0 %v453
    %501 = vmatmul.f32.gmra.mxu0 %v483
    %v502 = vpop.f32.mrf.mxu0
    %v503 = vadd.f32 %v480, %v502
    %504 = vdwg.mxu0
    %505 = vmatpush.msra.mxu0 0.0
    %506 = vmatpush.msra.mxu0 0.0
    %507 = vmatpush.msra.mxu0 0.0
    %508 = vmatpush.msra.mxu0 0.0
    %509 = vmatpush.msra.mxu0 0.0
    %510 = vmatpush.msra.mxu0 0.0
    %511 = vmatpush.msra.mxu0 0.0
    %512 = vmatpush.msra.mxu0 0.0
    %513 = vmatpush.msra.mxu0 0.0
    %514 = vmatpush.msra.mxu0 0.0
    %515 = vmatpush.msra.mxu0 0.0
    %516 = vmatpush.msra.mxu0 0.0
    %517 = vmatpush.msra.mxu0 0.0
    %518 = vmatpush.msra.mxu0 %v472
    %519 = vmatpush.msra.mxu0 %v439
    %520 = vmatpush.msra.mxu0 %v454
    %521 = vmatmul.f32.gmra.mxu0 %v483
    %v522 = vpop.f32.mrf.mxu0
    %v523 = vadd.f32 %v480, %v522
    %524 = vdwg.mxu0
    %v525 = vmax.f32 %v503, 0.0
    %v526 = vmax.f32 %v523, 0.0
    %v527 = vadd.f32 %v525, %v526
    %528 = vadd.xlane.f32.xlu0 %v527
    %v529 = vpop.xlane.xlu0 %528
    %v530 = vmul.f32 %v529, 0.00390625
    %v531 = vsub.f32 %v525, %v530
    %v532 = vsub.f32 %v526, %v530
    %v533 = vmul.f32 %v531, %v531
    %v534 = vmul.f32 %v532, %v532
    %v535 = vadd.f32 %v533, %v534
    %536 = vadd.xlane.f32.xlu0 %v535
    %v537 = vpop.xlane.xlu0 %536
    %v538 = vmul.f32 %v537, 0.00390625
    %v539 = vadd.f32 %v538, 1e-05
    %v540 = vrsqrt.pop %v539
    %v541 = vmul.f32 %v540, %v539
    %v542 = vmul.f32 %v541, %v540
    %v543 = vmul.f32 0.5, %v542
    %v544 = vsub.f32 1.5, %v543
    %v545 = vmul.f32 %v540, %v544
    %vm546 = vweird.f32 %v539
    %vm547 = vweird.f32 %v540
    %vm548 = vmor %vm546, %vm547
    %v549 = vsel %vm548, %v540, %v545
    %v550 = vmul.f32 %v531, %v549
    %v551 = vmul.f32 %v532, %v549
    %v552 = vld [vmem:[%s3] sm:$0xff]
    %v553 = vld [vmem:[%s3 + $0x8] sm:$0xff]
    %v554 = vld [vmem:[%s3 + $0x10] sm:$0xff]
    %v555 = vld [vmem:[%s3 + $0x18] sm:$0xff]
    %v556 = vld [vmem:[%s4] sm:$0xff]
    %v557 = vld [vmem:[%s4 + $0x8] sm:$0xff]
    %v558 = vld [vmem:[%s4 + $0x10] sm:$0xff]
    %v559 = vld [vmem:[%s4 + $0x18] sm:$0xff]
    %561 = vset.pattern.permute.xlu0 0
    %562 = vperm.xlu0 %561, %v556
    %v563 = vpop.permute.xlu0 %562
    %566 = vset.pattern.permute.xlu0 0
    %567 = vperm.xlu0 %566, %v557
    %v568 = vpop.permute.xlu0 %567
    %571 = vset.pattern.permute.xlu0 0
    %572 = vperm.xlu0 %571, %v558
    %v573 = vpop.permute.xlu0 %572
    %576 = vset.pattern.permute.xlu0 0
    %577 = vperm.xlu0 %576, %v559
    %v578 = vpop.permute.xlu0 %577
    %vm580 = vcmask 261120
    %v582 = vsel %vm580, %v552, 0
    %v585 = vsel %vm580, %v553, 0
    %v588 = vsel %vm580, %v554, 0
    %v591 = vsel %vm580, %v555, 0
    %593 = vmatpush.msra.mxu0 0.0
    %594 = vmatpush.msra.mxu0 0.0
    %595 = vmatpush.msra.mxu0 0.0
    %596 = vmatpush.msra.mxu0 0.0
    %597 = vmatpush.msra.mxu0 0.0
    %598 = vmatpush.msra.mxu0 0.0
    %599 = vmatpush.msra.mxu0 0.0
    %600 = vmatpush.msra.mxu0 0.0
    %601 = vmatpush.msra.mxu0 0.0
    %602 = vmatpush.msra.mxu0 0.0
    %603 = vmatpush.msra.mxu0 0.0
    %604 = vmatpush.msra.mxu0 0.0
    %605 = vmatpush.msra.mxu0 %v151
    %606 = vmatpush.msra.mxu0 %v550
    %607 = vmatpush.msra.mxu0 %v431
    %608 = vmatpush.msra.mxu0 %v312
    %609 = vmatmul.f32.gmra.mxu0 %v582
    %v610 = vpop.f32.mrf.mxu0
    %v611 = vadd.f32 %v563, %v610
    %612 = vmatmul.f32.gmra.mxu0 %v585
    %v613 = vpop.f32.mrf.mxu0
    %v614 = vadd.f32 %v568, %v613
    %615 = vmatmul.f32.gmra.mxu0 %v588
    %v616 = vpop.f32.mrf.mxu0
    %v617 = vadd.f32 %v573, %v616
    %618 = vmatmul.f32.gmra.mxu0 %v591
    %v619 = vpop.f32.mrf.mxu0
    %v620 = vadd.f32 %v578, %v619
    %621 = vdwg.mxu0
    %622 = vmatpush.msra.mxu0 0.0
    %623 = vmatpush.msra.mxu0 0.0
    %624 = vmatpush.msra.mxu0 0.0
    %625 = vmatpush.msra.mxu0 0.0
    %626 = vmatpush.msra.mxu0 0.0
    %627 = vmatpush.msra.mxu0 0.0
    %628 = vmatpush.msra.mxu0 0.0
    %629 = vmatpush.msra.mxu0 0.0
    %630 = vmatpush.msra.mxu0 0.0
    %631 = vmatpush.msra.mxu0 0.0
    %632 = vmatpush.msra.mxu0 0.0
    %633 = vmatpush.msra.mxu0 0.0
    %634 = vmatpush.msra.mxu0 %v152
    %635 = vmatpush.msra.mxu0 %v551
    %636 = vmatpush.msra.mxu0 %v432
    %637 = vmatpush.msra.mxu0 %v313
    %638 = vmatmul.f32.gmra.mxu0 %v582
    %v639 = vpop.f32.mrf.mxu0
    %v640 = vadd.f32 %v563, %v639
    %641 = vmatmul.f32.gmra.mxu0 %v585
    %v642 = vpop.f32.mrf.mxu0
    %v643 = vadd.f32 %v568, %v642
    %644 = vmatmul.f32.gmra.mxu0 %v588
    %v645 = vpop.f32.mrf.mxu0
    %v646 = vadd.f32 %v573, %v645
    %647 = vmatmul.f32.gmra.mxu0 %v591
    %v648 = vpop.f32.mrf.mxu0
    %v649 = vadd.f32 %v578, %v648
    %650 = vdwg.mxu0
    %v651 = vmax.f32 %v611, 0.0
    %v652 = vmax.f32 %v640, 0.0
    %v653 = vmax.f32 %v614, 0.0
    %v654 = vmax.f32 %v643, 0.0
    %v655 = vmax.f32 %v617, 0.0
    %v656 = vmax.f32 %v646, 0.0
    %v657 = vmax.f32 %v620, 0.0
    %v658 = vmax.f32 %v649, 0.0
    %v659 = vld [vmem:[%s5] sm:$0xff]
    %v660 = vld [vmem:[%s5 + $0x8] sm:$0xff]
    %v661 = vld [vmem:[%s5 + $0x10] sm:$0xff]
    %v662 = vld [vmem:[%s5 + $0x18] sm:$0xff]
    %v663 = vld [vmem:[%s6] sm:$0xff]
    %v664 = vld [vmem:[%s6 + $0x8] sm:$0xff]
    %v665 = vld [vmem:[%s6 + $0x10] sm:$0xff]
    %v666 = vld [vmem:[%s6 + $0x18] sm:$0xff]
    %668 = vset.pattern.permute.xlu0 0
    %669 = vperm.xlu0 %668, %v663
    %v670 = vpop.permute.xlu0 %669
    %673 = vset.pattern.permute.xlu0 0
    %674 = vperm.xlu0 %673, %v664
    %v675 = vpop.permute.xlu0 %674
    %678 = vset.pattern.permute.xlu0 0
    %679 = vperm.xlu0 %678, %v665
    %v680 = vpop.permute.xlu0 %679
    %683 = vset.pattern.permute.xlu0 0
    %684 = vperm.xlu0 %683, %v666
    %v685 = vpop.permute.xlu0 %684
    %v688 = vsel %vm580, %v659, 0
    %v691 = vsel %vm580, %v660, 0
    %v694 = vsel %vm580, %v661, 0
    %v697 = vsel %vm580, %v662, 0
    %699 = vmatpush.msra.mxu0 0.0
    %700 = vmatpush.msra.mxu0 0.0
    %701 = vmatpush.msra.mxu0 0.0
    %702 = vmatpush.msra.mxu0 0.0
    %703 = vmatpush.msra.mxu0 0.0
    %704 = vmatpush.msra.mxu0 0.0
    %705 = vmatpush.msra.mxu0 0.0
    %706 = vmatpush.msra.mxu0 0.0
    %707 = vmatpush.msra.mxu0 0.0
    %708 = vmatpush.msra.mxu0 0.0
    %709 = vmatpush.msra.mxu0 0.0
    %710 = vmatpush.msra.mxu0 0.0
    %711 = vmatpush.msra.mxu0 %v657
    %712 = vmatpush.msra.mxu0 %v655
    %713 = vmatpush.msra.mxu0 %v653
    %714 = vmatpush.msra.mxu0 %v651
    %715 = vmatmul.f32.gmra.mxu0 %v688
    %v716 = vpop.f32.mrf.mxu0
    %v717 = vadd.f32 %v670, %v716
    %718 = vmatmul.f32.gmra.mxu0 %v691
    %v719 = vpop.f32.mrf.mxu0
    %v720 = vadd.f32 %v675, %v719
    %721 = vmatmul.f32.gmra.mxu0 %v694
    %v722 = vpop.f32.mrf.mxu0
    %v723 = vadd.f32 %v680, %v722
    %724 = vmatmul.f32.gmra.mxu0 %v697
    %v725 = vpop.f32.mrf.mxu0
    %v726 = vadd.f32 %v685, %v725
    %727 = vdwg.mxu0
    %728 = vmatpush.msra.mxu0 0.0
    %729 = vmatpush.msra.mxu0 0.0
    %730 = vmatpush.msra.mxu0 0.0
    %731 = vmatpush.msra.mxu0 0.0
    %732 = vmatpush.msra.mxu0 0.0
    %733 = vmatpush.msra.mxu0 0.0
    %734 = vmatpush.msra.mxu0 0.0
    %735 = vmatpush.msra.mxu0 0.0
    %736 = vmatpush.msra.mxu0 0.0
    %737 = vmatpush.msra.mxu0 0.0
    %738 = vmatpush.msra.mxu0 0.0
    %739 = vmatpush.msra.mxu0 0.0
    %740 = vmatpush.msra.mxu0 %v658
    %741 = vmatpush.msra.mxu0 %v656
    %742 = vmatpush.msra.mxu0 %v654
    %743 = vmatpush.msra.mxu0 %v652
    %744 = vmatmul.f32.gmra.mxu0 %v688
    %v745 = vpop.f32.mrf.mxu0
    %v746 = vadd.f32 %v670, %v745
    %747 = vmatmul.f32.gmra.mxu0 %v691
    %v748 = vpop.f32.mrf.mxu0
    %v749 = vadd.f32 %v675, %v748
    %750 = vmatmul.f32.gmra.mxu0 %v694
    %v751 = vpop.f32.mrf.mxu0
    %v752 = vadd.f32 %v680, %v751
    %753 = vmatmul.f32.gmra.mxu0 %v697
    %v754 = vpop.f32.mrf.mxu0
    %v755 = vadd.f32 %v685, %v754
    %756 = vdwg.mxu0
    %v757 = vld [vmem:[%s11] sm:$0xff]
    %v758 = vld [vmem:[%s11 + $0x8] sm:$0xff]
    %v759 = vld [vmem:[%s11 + $0x10] sm:$0xff]
    %v760 = vld [vmem:[%s11 + $0x18] sm:$0xff]
    %v761 = vld [vmem:[%s11 + $0x20] sm:$0xff]
    %v762 = vld [vmem:[%s11 + $0x28] sm:$0xff]
    %v763 = vld [vmem:[%s11 + $0x30] sm:$0xff]
    %v764 = vld [vmem:[%s11 + $0x38] sm:$0xff]
    %v765 = vld [vmem:[%s11 + $0x40] sm:$0xff]
    %v766 = vld [vmem:[%s11 + $0x48] sm:$0xff]
    %v767 = vld [vmem:[%s11 + $0x50] sm:$0xff]
    %v768 = vld [vmem:[%s11 + $0x58] sm:$0xff]
    %v769 = vld [vmem:[%s11 + $0x60] sm:$0xff]
    %v770 = vld [vmem:[%s11 + $0x68] sm:$0xff]
    %v771 = vld [vmem:[%s11 + $0x70] sm:$0xff]
    %v772 = vld [vmem:[%s11 + $0x78] sm:$0xff]
    %v773 = vld [vmem:[%s11 + $0x80] sm:$0xff]
    %v774 = vld [vmem:[%s11 + $0x88] sm:$0xff]
    %v775 = vld [vmem:[%s11 + $0x90] sm:$0xff]
    %v776 = vld [vmem:[%s11 + $0x98] sm:$0xff]
    %v777 = vld [vmem:[%s11 + $0xa0] sm:$0xff]
    %v778 = vld [vmem:[%s11 + $0xa8] sm:$0xff]
    %v779 = vld [vmem:[%s11 + $0xb0] sm:$0xff]
    %v780 = vld [vmem:[%s11 + $0xb8] sm:$0xff]
    %v781 = vld [vmem:[%s11 + $0xc0] sm:$0xff]
    %v782 = vld [vmem:[%s11 + $0xc8] sm:$0xff]
    %v783 = vld [vmem:[%s11 + $0xd0] sm:$0xff]
    %v784 = vld [vmem:[%s11 + $0xd8] sm:$0xff]
    %v785 = vld [vmem:[%s11 + $0xe0] sm:$0xff]
    %v786 = vld [vmem:[%s11 + $0xe8] sm:$0xff]
    %v787 = vld [vmem:[%s11 + $0xf0] sm:$0xff]
    %v788 = vld [vmem:[%s11 + $0xf8] sm:$0xff]
    %789 = vmatpush.msra.mxu0 %v772
    %790 = vmatpush.msra.mxu0 %v771
    %791 = vmatpush.msra.mxu0 %v770
    %792 = vmatpush.msra.mxu0 %v769
    %793 = vmatpush.msra.mxu0 %v768
    %794 = vmatpush.msra.mxu0 %v767
    %795 = vmatpush.msra.mxu0 %v766
    %796 = vmatpush.msra.mxu0 %v765
    %797 = vmatpush.msra.mxu0 %v764
    %798 = vmatpush.msra.mxu0 %v763
    %799 = vmatpush.msra.mxu0 %v762
    %800 = vmatpush.msra.mxu0 %v761
    %801 = vmatpush.msra.mxu0 %v760
    %802 = vmatpush.msra.mxu0 %v759
    %803 = vmatpush.msra.mxu0 %v758
    %804 = vmatpush.msra.mxu0 %v757
    %805 = vmatmul.f32.gmra.mxu0 %v717
    %v806 = vpop.f32.mrf.mxu0
    %v807 = vadd.f32 0.0, %v806
    %808 = vmatmul.f32.gmra.mxu0 %v720
    %v809 = vpop.f32.mrf.mxu0
    %v810 = vadd.f32 0.0, %v809
    %811 = vmatmul.f32.gmra.mxu0 %v723
    %v812 = vpop.f32.mrf.mxu0
    %v813 = vadd.f32 0.0, %v812
    %814 = vmatmul.f32.gmra.mxu0 %v726
    %v815 = vpop.f32.mrf.mxu0
    %v816 = vadd.f32 0.0, %v815
    %817 = vdwg.mxu0
    %818 = vmatpush.msra.mxu0 %v788
    %819 = vmatpush.msra.mxu0 %v787
    %820 = vmatpush.msra.mxu0 %v786
    %821 = vmatpush.msra.mxu0 %v785
    %822 = vmatpush.msra.mxu0 %v784
    %823 = vmatpush.msra.mxu0 %v783
    %824 = vmatpush.msra.mxu0 %v782
    %825 = vmatpush.msra.mxu0 %v781
    %826 = vmatpush.msra.mxu0 %v780
    %827 = vmatpush.msra.mxu0 %v779
    %828 = vmatpush.msra.mxu0 %v778
    %829 = vmatpush.msra.mxu0 %v777
    %830 = vmatpush.msra.mxu0 %v776
    %831 = vmatpush.msra.mxu0 %v775
    %832 = vmatpush.msra.mxu0 %v774
    %833 = vmatpush.msra.mxu0 %v773
    %834 = vmatmul.f32.gmra.mxu0 %v746
    %v835 = vpop.f32.mrf.mxu0
    %v836 = vadd.f32 %v807, %v835
    %837 = vmatmul.f32.gmra.mxu0 %v749
    %v838 = vpop.f32.mrf.mxu0
    %v839 = vadd.f32 %v810, %v838
    %840 = vmatmul.f32.gmra.mxu0 %v752
    %v841 = vpop.f32.mrf.mxu0
    %v842 = vadd.f32 %v813, %v841
    %843 = vmatmul.f32.gmra.mxu0 %v755
    %v844 = vpop.f32.mrf.mxu0
    %v845 = vadd.f32 %v816, %v844
    %846 = vdwg.mxu0
    %v847 = vld [vmem:[%s7] sm:$0xff]
    %v848 = vld [vmem:[%s7 + $0x8] sm:$0xff]
    %v849 = vld [vmem:[%s7 + $0x10] sm:$0xff]
    %v850 = vld [vmem:[%s7 + $0x18] sm:$0xff]
    %v851 = vld [vmem:[%s7 + $0x20] sm:$0xff]
    %v852 = vld [vmem:[%s7 + $0x28] sm:$0xff]
    %v853 = vld [vmem:[%s7 + $0x30] sm:$0xff]
    %v854 = vld [vmem:[%s7 + $0x38] sm:$0xff]
    %v855 = vld [vmem:[%s7 + $0x40] sm:$0xff]
    %v856 = vld [vmem:[%s7 + $0x48] sm:$0xff]
    %v857 = vld [vmem:[%s7 + $0x50] sm:$0xff]
    %v858 = vld [vmem:[%s7 + $0x58] sm:$0xff]
    %v859 = vld [vmem:[%s7 + $0x60] sm:$0xff]
    %v860 = vld [vmem:[%s7 + $0x68] sm:$0xff]
    %v861 = vld [vmem:[%s7 + $0x70] sm:$0xff]
    %v862 = vld [vmem:[%s7 + $0x78] sm:$0xff]
    %v863 = vld [vmem:[%s8] sm:$0xff]
    %v864 = vld [vmem:[%s8 + $0x8] sm:$0xff]
    %v865 = vld [vmem:[%s8 + $0x10] sm:$0xff]
    %v866 = vld [vmem:[%s8 + $0x18] sm:$0xff]
    %v867 = vld [vmem:[%s8 + $0x20] sm:$0xff]
    %v868 = vld [vmem:[%s8 + $0x28] sm:$0xff]
    %v869 = vld [vmem:[%s8 + $0x30] sm:$0xff]
    %v870 = vld [vmem:[%s8 + $0x38] sm:$0xff]
    %v871 = vld [vmem:[%s8 + $0x40] sm:$0xff]
    %v872 = vld [vmem:[%s8 + $0x48] sm:$0xff]
    %v873 = vld [vmem:[%s8 + $0x50] sm:$0xff]
    %v874 = vld [vmem:[%s8 + $0x58] sm:$0xff]
    %v875 = vld [vmem:[%s8 + $0x60] sm:$0xff]
    %v876 = vld [vmem:[%s8 + $0x68] sm:$0xff]
    %v877 = vld [vmem:[%s8 + $0x70] sm:$0xff]
    %v878 = vld [vmem:[%s8 + $0x78] sm:$0xff]
    %880 = vset.pattern.permute.xlu0 0
    %881 = vperm.xlu0 %880, %v863
    %v882 = vpop.permute.xlu0 %881
    %885 = vset.pattern.permute.xlu0 0
    %886 = vperm.xlu0 %885, %v864
    %v887 = vpop.permute.xlu0 %886
    %890 = vset.pattern.permute.xlu0 0
    %891 = vperm.xlu0 %890, %v865
    %v892 = vpop.permute.xlu0 %891
    %895 = vset.pattern.permute.xlu0 0
    %896 = vperm.xlu0 %895, %v866
    %v897 = vpop.permute.xlu0 %896
    %900 = vset.pattern.permute.xlu0 0
    %901 = vperm.xlu0 %900, %v867
    %v902 = vpop.permute.xlu0 %901
    %905 = vset.pattern.permute.xlu0 0
    %906 = vperm.xlu0 %905, %v868
    %v907 = vpop.permute.xlu0 %906
    %910 = vset.pattern.permute.xlu0 0
    %911 = vperm.xlu0 %910, %v869
    %v912 = vpop.permute.xlu0 %911
    %915 = vset.pattern.permute.xlu0 0
    %916 = vperm.xlu0 %915, %v870
    %v917 = vpop.permute.xlu0 %916
    %920 = vset.pattern.permute.xlu0 0
    %921 = vperm.xlu0 %920, %v871
    %v922 = vpop.permute.xlu0 %921
    %925 = vset.pattern.permute.xlu0 0
    %926 = vperm.xlu0 %925, %v872
    %v927 = vpop.permute.xlu0 %926
    %930 = vset.pattern.permute.xlu0 0
    %931 = vperm.xlu0 %930, %v873
    %v932 = vpop.permute.xlu0 %931
    %935 = vset.pattern.permute.xlu0 0
    %936 = vperm.xlu0 %935, %v874
    %v937 = vpop.permute.xlu0 %936
    %940 = vset.pattern.permute.xlu0 0
    %941 = vperm.xlu0 %940, %v875
    %v942 = vpop.permute.xlu0 %941
    %945 = vset.pattern.permute.xlu0 0
    %946 = vperm.xlu0 %945, %v876
    %v947 = vpop.permute.xlu0 %946
    %950 = vset.pattern.permute.xlu0 0
    %951 = vperm.xlu0 %950, %v877
    %v952 = vpop.permute.xlu0 %951
    %955 = vset.pattern.permute.xlu0 0
    %956 = vperm.xlu0 %955, %v878
    %v957 = vpop.permute.xlu0 %956
    %v960 = vsel %vm580, %v847, 0
    %v963 = vsel %vm580, %v848, 0
    %v966 = vsel %vm580, %v849, 0
    %v969 = vsel %vm580, %v850, 0
    %v972 = vsel %vm580, %v851, 0
    %v975 = vsel %vm580, %v852, 0
    %v978 = vsel %vm580, %v853, 0
    %v981 = vsel %vm580, %v854, 0
    %v984 = vsel %vm580, %v855, 0
    %v987 = vsel %vm580, %v856, 0
    %v990 = vsel %vm580, %v857, 0
    %v993 = vsel %vm580, %v858, 0
    %v996 = vsel %vm580, %v859, 0
    %v999 = vsel %vm580, %v860, 0
    %v1002 = vsel %vm580, %v861, 0
    %v1005 = vsel %vm580, %v862, 0
    %1007 = vmatpush.msra.mxu0 0.0
    %1008 = vmatpush.msra.mxu0 0.0
    %1009 = vmatpush.msra.mxu0 0.0
    %1010 = vmatpush.msra.mxu0 0.0
    %1011 = vmatpush.msra.mxu0 0.0
    %1012 = vmatpush.msra.mxu0 0.0
    %1013 = vmatpush.msra.mxu0 0.0
    %1014 = vmatpush.msra.mxu0 0.0
    %1015 = vmatpush.msra.mxu0 0.0
    %1016 = vmatpush.msra.mxu0 0.0
    %1017 = vmatpush.msra.mxu0 0.0
    %1018 = vmatpush.msra.mxu0 0.0
    %1019 = vmatpush.msra.mxu0 %v845
    %1020 = vmatpush.msra.mxu0 %v842
    %1021 = vmatpush.msra.mxu0 %v839
    %1022 = vmatpush.msra.mxu0 %v836
    %1023 = vmatmul.f32.gmra.mxu0 %v960
    %v1024 = vpop.f32.mrf.mxu0
    %v1025 = vadd.f32 %v882, %v1024
    %1026 = vmatmul.f32.gmra.mxu0 %v963
    %v1027 = vpop.f32.mrf.mxu0
    %v1028 = vadd.f32 %v887, %v1027
    %1029 = vmatmul.f32.gmra.mxu0 %v966
    %v1030 = vpop.f32.mrf.mxu0
    %v1031 = vadd.f32 %v892, %v1030
    %1032 = vmatmul.f32.gmra.mxu0 %v969
    %v1033 = vpop.f32.mrf.mxu0
    %v1034 = vadd.f32 %v897, %v1033
    %1035 = vmatmul.f32.gmra.mxu0 %v972
    %v1036 = vpop.f32.mrf.mxu0
    %v1037 = vadd.f32 %v902, %v1036
    %1038 = vmatmul.f32.gmra.mxu0 %v975
    %v1039 = vpop.f32.mrf.mxu0
    %v1040 = vadd.f32 %v907, %v1039
    %1041 = vmatmul.f32.gmra.mxu0 %v978
    %v1042 = vpop.f32.mrf.mxu0
    %v1043 = vadd.f32 %v912, %v1042
    %1044 = vmatmul.f32.gmra.mxu0 %v981
    %v1045 = vpop.f32.mrf.mxu0
    %v1046 = vadd.f32 %v917, %v1045
    %1047 = vmatmul.f32.gmra.mxu0 %v984
    %v1048 = vpop.f32.mrf.mxu0
    %v1049 = vadd.f32 %v922, %v1048
    %1050 = vmatmul.f32.gmra.mxu0 %v987
    %v1051 = vpop.f32.mrf.mxu0
    %v1052 = vadd.f32 %v927, %v1051
    %1053 = vmatmul.f32.gmra.mxu0 %v990
    %v1054 = vpop.f32.mrf.mxu0
    %v1055 = vadd.f32 %v932, %v1054
    %1056 = vmatmul.f32.gmra.mxu0 %v993
    %v1057 = vpop.f32.mrf.mxu0
    %v1058 = vadd.f32 %v937, %v1057
    %1059 = vmatmul.f32.gmra.mxu0 %v996
    %v1060 = vpop.f32.mrf.mxu0
    %v1061 = vadd.f32 %v942, %v1060
    %1062 = vmatmul.f32.gmra.mxu0 %v999
    %v1063 = vpop.f32.mrf.mxu0
    %v1064 = vadd.f32 %v947, %v1063
    %1065 = vmatmul.f32.gmra.mxu0 %v1002
    %v1066 = vpop.f32.mrf.mxu0
    %v1067 = vadd.f32 %v952, %v1066
    %1068 = vmatmul.f32.gmra.mxu0 %v1005
    %v1069 = vpop.f32.mrf.mxu0
    %v1070 = vadd.f32 %v957, %v1069
    %1071 = vdwg.mxu0
    %v1072 = vmax.f32 %v1025, 0.0
    %v1073 = vmax.f32 %v1028, 0.0
    %v1074 = vmax.f32 %v1031, 0.0
    %v1075 = vmax.f32 %v1034, 0.0
    %v1076 = vmax.f32 %v1037, 0.0
    %v1077 = vmax.f32 %v1040, 0.0
    %v1078 = vmax.f32 %v1043, 0.0
    %v1079 = vmax.f32 %v1046, 0.0
    %v1080 = vmax.f32 %v1049, 0.0
    %v1081 = vmax.f32 %v1052, 0.0
    %v1082 = vmax.f32 %v1055, 0.0
    %v1083 = vmax.f32 %v1058, 0.0
    %v1084 = vmax.f32 %v1061, 0.0
    %v1085 = vmax.f32 %v1064, 0.0
    %v1086 = vmax.f32 %v1067, 0.0
    %v1087 = vmax.f32 %v1070, 0.0
    %v1088 = vld [vmem:[%s9] sm:$0xff]
    %v1089 = vld [vmem:[%s9 + $0x8] sm:$0xff]
    %v1090 = vld [vmem:[%s9 + $0x10] sm:$0xff]
    %v1091 = vld [vmem:[%s9 + $0x18] sm:$0xff]
    %v1092 = vld [vmem:[%s10] sm:$0xff]
    %v1093 = vld [vmem:[%s10 + $0x8] sm:$0xff]
    %v1094 = vld [vmem:[%s10 + $0x10] sm:$0xff]
    %v1095 = vld [vmem:[%s10 + $0x18] sm:$0xff]
    %1097 = vset.pattern.permute.xlu0 0
    %1098 = vperm.xlu0 %1097, %v1092
    %v1099 = vpop.permute.xlu0 %1098
    %1102 = vset.pattern.permute.xlu0 0
    %1103 = vperm.xlu0 %1102, %v1093
    %v1104 = vpop.permute.xlu0 %1103
    %1107 = vset.pattern.permute.xlu0 0
    %1108 = vperm.xlu0 %1107, %v1094
    %v1109 = vpop.permute.xlu0 %1108
    %1112 = vset.pattern.permute.xlu0 0
    %1113 = vperm.xlu0 %1112, %v1095
    %v1114 = vpop.permute.xlu0 %1113
    %1116 = vmatpush.msra.mxu0 %v1087
    %1117 = vmatpush.msra.mxu0 %v1086
    %1118 = vmatpush.msra.mxu0 %v1085
    %1119 = vmatpush.msra.mxu0 %v1084
    %1120 = vmatpush.msra.mxu0 %v1083
    %1121 = vmatpush.msra.mxu0 %v1082
    %1122 = vmatpush.msra.mxu0 %v1081
    %1123 = vmatpush.msra.mxu0 %v1080
    %1124 = vmatpush.msra.mxu0 %v1079
    %1125 = vmatpush.msra.mxu0 %v1078
    %1126 = vmatpush.msra.mxu0 %v1077
    %1127 = vmatpush.msra.mxu0 %v1076
    %1128 = vmatpush.msra.mxu0 %v1075
    %1129 = vmatpush.msra.mxu0 %v1074
    %1130 = vmatpush.msra.mxu0 %v1073
    %1131 = vmatpush.msra.mxu0 %v1072
    %1132 = vmatmul.f32.gmra.mxu0 %v1088
    %v1133 = vpop.f32.mrf.mxu0
    %v1134 = vadd.f32 %v1099, %v1133
    %1135 = vmatmul.f32.gmra.mxu0 %v1089
    %v1136 = vpop.f32.mrf.mxu0
    %v1137 = vadd.f32 %v1104, %v1136
    %1138 = vmatmul.f32.gmra.mxu0 %v1090
    %v1139 = vpop.f32.mrf.mxu0
    %v1140 = vadd.f32 %v1109, %v1139
    %1141 = vmatmul.f32.gmra.mxu0 %v1091
    %v1142 = vpop.f32.mrf.mxu0
    %v1143 = vadd.f32 %v1114, %v1142
    %1144 = vdwg.mxu0
    %v1145 = vxor.u32 %v1134, 2147483648
    %v1146 = vxor.u32 %v1137, 2147483648
    %v1147 = vxor.u32 %v1140, 2147483648
    %v1148 = vxor.u32 %v1143, 2147483648
    %v1149 = vmul.f32 %v1145, 1.442695
    %v1150 = vpow.pop %v1149
    %v1151 = vmul.f32 %v1146, 1.442695
    %v1152 = vpow.pop %v1151
    %v1153 = vmul.f32 %v1147, 1.442695
    %v1154 = vpow.pop %v1153
    %v1155 = vmul.f32 %v1148, 1.442695
    %v1156 = vpow.pop %v1155
    %v1157 = vadd.f32 %v1150, 1.0
    %v1158 = vadd.f32 %v1152, 1.0
    %v1159 = vadd.f32 %v1154, 1.0
    %v1160 = vadd.f32 %v1156, 1.0
    %v1161 = vrcp.pop %v1157
    %v1162 = vmul.f32 %v1157, %v1161
    %v1163 = vsub.f32 1.0, %v1162
    %v1164 = vmul.f32 %v1161, %v1163
    %v1165 = vadd.f32 %v1161, %v1164
    %vm1166 = vweird.f32 %v1157
    %vm1167 = vweird.f32 %v1161
    %vm1168 = vmor %vm1166, %vm1167
    %v1169 = vsel %vm1168, %v1161, %v1165
    %v1170 = vand.u32 2147483647, %v1157
    %vm1171 = vcmp.eq.f32.partialorder %v1170, 8.507059e+37
    %v1172 = vand.u32 %v1157, 2147483648
    %v1173 = vor.u32 1.1754944e-38, %v1172
    %v1174 = vsel %vm1171, %v1173, %v1169
    %v1175 = vmul.f32 1.0, %v1174
    %v1176 = vrcp.pop %v1158
    %v1177 = vmul.f32 %v1158, %v1176
    %v1178 = vsub.f32 1.0, %v1177
    %v1179 = vmul.f32 %v1176, %v1178
    %v1180 = vadd.f32 %v1176, %v1179
    %vm1181 = vweird.f32 %v1158
    %vm1182 = vweird.f32 %v1176
    %vm1183 = vmor %vm1181, %vm1182
    %v1184 = vsel %vm1183, %v1176, %v1180
    %v1185 = vand.u32 2147483647, %v1158
    %vm1186 = vcmp.eq.f32.partialorder %v1185, 8.507059e+37
    %v1187 = vand.u32 %v1158, 2147483648
    %v1188 = vor.u32 1.1754944e-38, %v1187
    %v1189 = vsel %vm1186, %v1188, %v1184
    %v1190 = vmul.f32 1.0, %v1189
    %v1191 = vrcp.pop %v1159
    %v1192 = vmul.f32 %v1159, %v1191
    %v1193 = vsub.f32 1.0, %v1192
    %v1194 = vmul.f32 %v1191, %v1193
    %v1195 = vadd.f32 %v1191, %v1194
    %vm1196 = vweird.f32 %v1159
    %vm1197 = vweird.f32 %v1191
    %vm1198 = vmor %vm1196, %vm1197
    %v1199 = vsel %vm1198, %v1191, %v1195
    %v1200 = vand.u32 2147483647, %v1159
    %vm1201 = vcmp.eq.f32.partialorder %v1200, 8.507059e+37
    %v1202 = vand.u32 %v1159, 2147483648
    %v1203 = vor.u32 1.1754944e-38, %v1202
    %v1204 = vsel %vm1201, %v1203, %v1199
    %v1205 = vmul.f32 1.0, %v1204
    %v1206 = vrcp.pop %v1160
    %v1207 = vmul.f32 %v1160, %v1206
    %v1208 = vsub.f32 1.0, %v1207
    %v1209 = vmul.f32 %v1206, %v1208
    %v1210 = vadd.f32 %v1206, %v1209
    %vm1211 = vweird.f32 %v1160
    %vm1212 = vweird.f32 %v1206
    %vm1213 = vmor %vm1211, %vm1212
    %v1214 = vsel %vm1213, %v1206, %v1210
    %v1215 = vand.u32 2147483647, %v1160
    %vm1216 = vcmp.eq.f32.partialorder %v1215, 8.507059e+37
    %v1217 = vand.u32 %v1160, 2147483648
    %v1218 = vor.u32 1.1754944e-38, %v1217
    %v1219 = vsel %vm1216, %v1218, %v1214
    %v1220 = vmul.f32 1.0, %v1219
    %v1221 = vld [vmem:[%s12] sm:$0xf]
    %1223 = vst [vmem:[#allocation1] ss:$4 sm:$0xff] %v1221
    %v1224 = vld.sshfl [vmem:[#allocation1] sm:$0xff pattern:$0x73625140]
    %v1225 = vld.sshfl [vmem:[#allocation1 + $0x8] sm:$0xff pattern:$0x73625140]
    %vm1226 = vcmask 15360
    %v1228 = vsel %vm1226, %v1175, 0
    %v1231 = vsel %vm1226, %v1190, 0
    %v1234 = vsel %vm1226, %v1205, 0
    %v1237 = vsel %vm1226, %v1220, 0
    %vm1239 = vcmask 1041408
    %v1240 = vsel %vm1239, %v1224, 0
    %v1242 = vsel %vm1239, %v1225, 0
    %1244 = vmatpush.msra.mxu0 0.0
    %1245 = vmatpush.msra.mxu0 0.0
    %1246 = vmatpush.msra.mxu0 0.0
    %1247 = vmatpush.msra.mxu0 0.0
    %1248 = vmatpush.msra.mxu0 0.0
    %1249 = vmatpush.msra.mxu0 0.0
    %1250 = vmatpush.msra.mxu0 0.0
    %1251 = vmatpush.msra.mxu0 0.0
    %1252 = vmatpush.msra.mxu0 0.0
    %1253 = vmatpush.msra.mxu0 0.0
    %1254 = vmatpush.msra.mxu0 0.0
    %1255 = vmatpush.msra.mxu0 0.0
    %1256 = vmatpush.msra.mxu0 0.0
    %1257 = vmatpush.msra.mxu0 0.0
    %1258 = vmatpush.msra.mxu0 0.0
    %1259 = vmatpush.msra.mxu0 %v1240
    %1260 = vmatmul.f32.gmra.mxu0 %v1228
    %v1261 = vpop.f32.mrf.mxu0
    %v1262 = vadd.f32 0.0, %v1261
    %1263 = vmatmul.f32.gmra.mxu0 %v1231
    %v1264 = vpop.f32.mrf.mxu0
    %v1265 = vadd.f32 0.0, %v1264
    %1266 = vmatmul.f32.gmra.mxu0 %v1234
    %v1267 = vpop.f32.mrf.mxu0
    %v1268 = vadd.f32 0.0, %v1267
    %1269 = vmatmul.f32.gmra.mxu0 %v1237
    %v1270 = vpop.f32.mrf.mxu0
    %v1271 = vadd.f32 0.0, %v1270
    %1272 = vdwg.mxu0
    %1273 = vmatpush.msra.mxu0 0.0
    %1274 = vmatpush.msra.mxu0 0.0
    %1275 = vmatpush.msra.mxu0 0.0
    %1276 = vmatpush.msra.mxu0 0.0
    %1277 = vmatpush.msra.mxu0 0.0
    %1278 = vmatpush.msra.mxu0 0.0
    %1279 = vmatpush.msra.mxu0 0.0
    %1280 = vmatpush.msra.mxu0 0.0
    %1281 = vmatpush.msra.mxu0 0.0
    %1282 = vmatpush.msra.mxu0 0.0
    %1283 = vmatpush.msra.mxu0 0.0
    %1284 = vmatpush.msra.mxu0 0.0
    %1285 = vmatpush.msra.mxu0 0.0
    %1286 = vmatpush.msra.mxu0 0.0
    %1287 = vmatpush.msra.mxu0 0.0
    %1288 = vmatpush.msra.mxu0 %v1242
    %1289 = vmatmul.f32.gmra.mxu0 %v1228
    %v1290 = vpop.f32.mrf.mxu0
    %v1291 = vadd.f32 0.0, %v1290
    %1292 = vmatmul.f32.gmra.mxu0 %v1231
    %v1293 = vpop.f32.mrf.mxu0
    %v1294 = vadd.f32 0.0, %v1293
    %1295 = vmatmul.f32.gmra.mxu0 %v1234
    %v1296 = vpop.f32.mrf.mxu0
    %v1297 = vadd.f32 0.0, %v1296
    %1298 = vmatmul.f32.gmra.mxu0 %v1237
    %v1299 = vpop.f32.mrf.mxu0
    %v1300 = vadd.f32 0.0, %v1299
    %1301 = vdwg.mxu0
    %v1302 = vmul.f32 %v717, %v1262
    %v1303 = vmul.f32 %v746, %v1291
    %v1304 = vmul.f32 %v720, %v1265
    %v1305 = vmul.f32 %v749, %v1294
    %v1306 = vmul.f32 %v723, %v1268
    %v1307 = vmul.f32 %v752, %v1297
    %v1308 = vmul.f32 %v726, %v1271
    %v1309 = vmul.f32 %v755, %v1300
    %v1310 = vadd.f32 %v45, %v1302
    %v1311 = vadd.f32 %v46, %v1303
    %v1312 = vadd.f32 %v47, %v1304
    %v1313 = vadd.f32 %v48, %v1305
    %v1314 = vadd.f32 %v49, %v1306
    %v1315 = vadd.f32 %v50, %v1307
    %v1316 = vadd.f32 %v51, %v1308
    %v1317 = vadd.f32 %v52, %v1309
    %1318 = vst [vmem:[#allocation3] sm:$0xff] %v1310
    %1319 = vst [vmem:[#allocation3 + $0x8] sm:$0xff] %v1311
    %1320 = vst [vmem:[#allocation3 + $0x10] sm:$0xff] %v1312
    %1321 = vst [vmem:[#allocation3 + $0x18] sm:$0xff] %v1313
    %1322 = vst [vmem:[#allocation3 + $0x20] sm:$0xff] %v1314
    %1323 = vst [vmem:[#allocation3 + $0x28] sm:$0xff] %v1315
    %1324 = vst [vmem:[#allocation3 + $0x30] sm:$0xff] %v1316
    %1325 = vst [vmem:[#allocation3 + $0x38] sm:$0xff] %v1317
    // Predicated region
    $region54: #{tpu_custom_call.1} parent=1 // pred_check
      _
    $region55: #{tpu_custom_call.1} parent=1 // pred_check_branch
      %1327 = sbr.rel (0) target = $region57
    $region56: #{tpu_custom_call.1} parent=1 // pred_region
      %1329 = vsyncadd [#allocation4], 0
      %s1330 = sshll.u32 [#allocation3], 4
      %s1331 = int_to_ptr.vmem [resolvable:$true] %s1330
      %s1332 = sshll.u32 %s13, 4
      %s1333 = int_to_ptr.hbm [resolvable:$true] %s1332
      %1338 = dma.vmem_to_hbm [thread:$0]  %s1331, 1024, %s1333, [#allocation4], 256, 256, 16
    $region57: #{tpu_custom_call.1} parent=1 // pred_fallthru
      _
    // Predicated region
    $region58: #{tpu_custom_call.1} parent=1 // pred_check
      _
    $region59: #{tpu_custom_call.1} parent=1 // pred_check_branch
      %1340 = sbr.rel (0) target = $region61
    $region60: #{tpu_custom_call.1} parent=1 // pred_region
      %1342 = dma.done [#allocation4], 1024
    $region61: #{tpu_custom_call.1} parent=1 // pred_fallthru
      _
    %1343 = vsyncpa [#allocation4], 1

</llo_original>
